<compile_context>
chip_gen: v5e
topology: v5e:2x2
jax: 0.10.0
libtpu: 0.0.40
codegen_flags: <defaults>
</compile_context>

<pallas_src>
import math
import jax
import jax.numpy as jnp
from jax.experimental import pallas as pl
from jax.experimental.pallas import tpu as pltpu


# ----------------------------- Pallas kernel -------------------------------
def _gabor_kernel(x_ref, a_ref, b_ref, w_ref, c_ref, bias_ref, o_ref):
    # x_ref:    (1, TN, Dp)   folded coordinates
    # a_ref:    (1, Dp, Hp)   gamma^2                    (block-diag if folded)
    # b_ref:    (1, Dp, Hp)   -2 * gamma^2 * mu          (block-diag if folded)
    # w_ref:    (1, Dp, Hp)   linear weight, transposed  (block-diag if folded)
    # c_ref:    (1, 1,  Hp)   sum_d (gamma * mu)^2
    # bias_ref: (1, 1,  Hp)
    # o_ref:    (1, TN, Hp)
    hi = jax.lax.Precision.HIGHEST
    x = x_ref[0].astype(jnp.float32)                       # (TN, Dp)
    quad = (jnp.dot(x * x, a_ref[0], precision=hi,
                    preferred_element_type=jnp.float32)
            + jnp.dot(x, b_ref[0], precision=hi,
                      preferred_element_type=jnp.float32)
            + c_ref[0])                                    # (TN, Hp)
    lin = (jnp.dot(x, w_ref[0], precision=hi,
                   preferred_element_type=jnp.float32)
           + bias_ref[0])                                  # (TN, Hp)
    o_ref[0] = (jnp.exp(-0.5 * quad) * jnp.sin(lin)).astype(o_ref.dtype)


# ------------------------------- wrapper ------------------------------------
def _round_up(v, m):
    return ((v + m - 1) // m) * m


def _block_diag_tile(mat, k):
    """(B, D, H) -> (B, k*D, k*H) block-diagonal replication."""
    if k == 1:
        return mat
    bsz, d, h = mat.shape
    eye = jnp.eye(k, dtype=mat.dtype)
    return jnp.einsum("jl,bdh->bjdlh", eye, mat).reshape(bsz, k * d, k * h)


def gabor_layer_forward(x, gamma, mu, weight, bias, *,
                        max_tile_rows=4096, out_dtype=jnp.float32):
    """x: (B, *spatial, D); gamma: (B,H,1) or (B,H,D); mu/weight: (B,H,D); bias: (B,H)."""
    B = x.shape[0]
    D = x.shape[-1]
    spatial = x.shape[1:-1]
    N = int(math.prod(spatial))
    H = mu.shape[1]

    f32 = jnp.float32
    xf = x.reshape(B, N, D).astype(f32)
    g = jnp.broadcast_to(gamma.astype(f32), (B, H, D))     # isotropic -> expand
    m = mu.astype(f32)
    w = weight.astype(f32)
    b = bias.astype(f32)

    # MXU operands (transposed to (B, D, H)).
    g2 = g * g
    A = jnp.transpose(g2, (0, 2, 1))                        # gamma^2
    Bq = jnp.transpose(-2.0 * g2 * m, (0, 2, 1))            # -2*gamma^2*mu
    WT = jnp.transpose(w, (0, 2, 1))                        # W^T
    c = jnp.sum((g * m) ** 2, axis=-1)                      # (B, H)

    # ---- lane density: fold k spatial rows into lanes, or pad H to 128k ----
    if H % 128 == 0:
        k, Hpad = 1, H
    elif 128 % H == 0 and N % (128 // H) == 0:
        k, Hpad = 128 // H, H
    else:
        k, Hpad = 1, _round_up(H, 128)

    if Hpad != H:
        padH = Hpad - H
        A = jnp.pad(A, ((0, 0), (0, 0), (0, padH)))
        Bq = jnp.pad(Bq, ((0, 0), (0, 0), (0, padH)))
        WT = jnp.pad(WT, ((0, 0), (0, 0), (0, padH)))
        c = jnp.pad(c, ((0, 0), (0, padH)))
        b = jnp.pad(b, ((0, 0), (0, padH)))

    Np = N // k                      # folded row count
    Dp = k * D
    Hp = k * Hpad

    xf = xf.reshape(B, Np, Dp)                               # pure reshape fold
    A_f = _block_diag_tile(A, k)
    B_f = _block_diag_tile(Bq, k)
    W_f = _block_diag_tile(WT, k)
    c_f = jnp.tile(c, (1, k)).reshape(B, 1, Hp)
    b_f = jnp.tile(b, (1, k)).reshape(B, 1, Hp)

    # ---- row-tile size: budget double-buffered x+out tiles (~12 MiB) ----
    bytes_per_row = 4 * (Dp + Hp) * 2                        # 2-deep pipeline
    param_bytes = 4 * (3 * Dp * Hp + 2 * Hp) * 2
    budget = 12 * 1024 * 1024
    cap = max(8, (budget - param_bytes) // max(bytes_per_row, 1))
    cap = min(cap, max_tile_rows)
    cap = max(8, (cap // 8) * 8)
    steps = -(-Np // cap)                                    # cdiv
    tn = _round_up(-(-Np // steps), 8)
    Np_pad = tn * steps
    if Np_pad != Np:
        xf = jnp.pad(xf, ((0, 0), (0, Np_pad - Np), (0, 0)))

    out = pl.pallas_call(
        _gabor_kernel,
        out_shape=jax.ShapeDtypeStruct((B, Np_pad, Hp), out_dtype),
        grid_spec=pltpu.PrefetchScalarGridSpec(
            num_scalar_prefetch=0,
            grid=(B, steps),                                 # b outer, rows inner
            in_specs=[
                pl.BlockSpec((1, tn, Dp), lambda bb, i: (bb, i, 0)),   # x
                pl.BlockSpec((1, Dp, Hp), lambda bb, i: (bb, 0, 0)),   # A
                pl.BlockSpec((1, Dp, Hp), lambda bb, i: (bb, 0, 0)),   # Bq
                pl.BlockSpec((1, Dp, Hp), lambda bb, i: (bb, 0, 0)),   # W^T
                pl.BlockSpec((1, 1, Hp), lambda bb, i: (bb, 0, 0)),    # c
                pl.BlockSpec((1, 1, Hp), lambda bb, i: (bb, 0, 0)),    # bias
            ],
            out_specs=pl.BlockSpec((1, tn, Hp), lambda bb, i: (bb, i, 0)),
        ),
        compiler_params=pltpu.CompilerParams(
            dimension_semantics=("parallel", "parallel"),
            vmem_limit_bytes=32 * 1024 * 1024),
    )(xf, A_f, B_f, W_f, c_f, b_f)

    out = out[:, :Np, :]                                     # drop row padding
    out = out.reshape(B, Np * k, Hpad)[:, :, :H]             # unfold / drop H pad
    return out.reshape(B, *spatial, H)


# -------------------- deterministic parameter construction ------------------
def init_gabor_params(key, dim_linear, hidden_channels, input_scale, alpha, beta,
                      init_spatial_value, covariance, batch_size):
    k_mu, k_gamma, k_w, k_b = jax.random.split(key, 4)
    mu = init_spatial_value * (
        2.0 * jax.random.uniform(k_mu, (batch_size, hidden_channels, dim_linear)) - 1.0)
    gdim = 1 if covariance == "isotropic" else dim_linear
    # torch Gamma(alpha, beta) has rate beta -> standard gamma / beta
    gamma = jax.random.gamma(k_gamma, alpha, (batch_size, hidden_channels, gdim)) / beta
    bound = 1.0 / math.sqrt(dim_linear)      # nn.Linear-style default init
    weight = jax.random.uniform(k_w, (batch_size, hidden_channels, dim_linear),
                                minval=-bound, maxval=bound)
    weight = weight * input_scale * gamma    # as in GaborLayer.__init__
    bias = jax.random.uniform(k_b, (batch_size, hidden_channels),
                              minval=-math.pi, maxval=math.pi)
    return gamma, mu, weight, bias


# ----------------------------- pure-JAX reference ---------------------------
def gabor_reference(x, gamma, mu, weight, bias):
    B = x.shape[0]
    n_dom = x.ndim - 2
    ones = (1,) * n_dom
    g = jnp.broadcast_to(gamma, (B,) + gamma.shape[1:]).reshape(B, *ones, *gamma.shape[1:])
    m = mu.reshape(B, *ones, *mu.shape[1:])
    w = weight.reshape(B, *ones, *weight.shape[1:])
    bb = bias.reshape(B, *ones, -1)
    xe = x[..., None, :]
    gw = jnp.exp(-0.5 * jnp.sum((g * (xe - m)) ** 2, axis=-1))
    lin = jnp.sum(xe * w, axis=-1) + bb          # exact elementwise linear
    return gw * jnp.sin(lin)


if __name__ == "__main__":
    # Coordinate grid of a 16x16 image, 2 "batched" filter banks,
    # dim_linear=2 coordinates, 32 hidden channels.
    batch_size = 2
    dim_linear = 2
    hidden_channels = 32
    spatial = (16, 16)

    key = jax.random.PRNGKey(0)
    k_x, k_p = jax.random.split(key)

    x = jax.random.uniform(k_x, (batch_size, *spatial, dim_linear),
                           minval=-1.0, maxval=1.0, dtype=jnp.float32)

    gamma, mu, weight, bias = init_gabor_params(
        k_p, dim_linear, hidden_channels,
        input_scale=2.0, alpha=6.0, beta=1.0,
        init_spatial_value=1.0, covariance="anisotropic",
        batch_size=batch_size)

    out = gabor_layer_forward(x, gamma, mu, weight, bias)
    out = jax.block_until_ready(out)

    ref = gabor_reference(x, gamma, mu, weight, bias)
    assert out.shape == (batch_size, *spatial, hidden_channels)
    err = float(jnp.max(jnp.abs(out - ref)))
    assert jnp.allclose(out, ref, atol=1e-3, rtol=1e-3), err

    print("KERNEL_OK")
</pallas_src>

<mosaic_0001>
module attributes {stable_mosaic.version = 11 : i64} {
  func.func @_gabor_kernel(%arg0: i32, %arg1: i32, %arg2: memref<1x64x8xf32, #tpu.memory_space<vmem>>, %arg3: memref<1x8x128xf32, #tpu.memory_space<vmem>>, %arg4: memref<1x8x128xf32, #tpu.memory_space<vmem>>, %arg5: memref<1x8x128xf32, #tpu.memory_space<vmem>>, %arg6: memref<1x1x128xf32, #tpu.memory_space<vmem>>, %arg7: memref<1x1x128xf32, #tpu.memory_space<vmem>>, %arg8: memref<1x64x128xf32, #tpu.memory_space<vmem>>) attributes {dimension_semantics = [#tpu.dimension_semantics<parallel>, #tpu.dimension_semantics<parallel>], iteration_bounds = array<i64: 2, 1>, scalar_prefetch = 0 : i64, scratch_operands = 0 : i64, tpu.core_type = #tpu.core_type<tc>, window_params = [{transform_indices = @transform_0, window_bounds = array<i64: 1, 64, 8>}, {transform_indices = @transform_1, window_bounds = array<i64: 1, 8, 128>}, {transform_indices = @transform_2, window_bounds = array<i64: 1, 8, 128>}, {transform_indices = @transform_3, window_bounds = array<i64: 1, 8, 128>}, {transform_indices = @transform_4, window_bounds = array<i64: 1, 1, 128>}, {transform_indices = @transform_5, window_bounds = array<i64: 1, 1, 128>}, {transform_indices = @transform_6, window_bounds = array<i64: 1, 64, 128>}]} {
    %c0 = arith.constant 0 : index
    %c0_0 = arith.constant 0 : index
    %c0_1 = arith.constant 0 : index
    %0 = vector.load %arg2[%c0, %c0_0, %c0_1] : memref<1x64x8xf32, #tpu.memory_space<vmem>>, vector<1x64x8xf32>
    %1 = vector.shape_cast %0 : vector<1x64x8xf32> to vector<64x8xf32>
    %2 = arith.mulf %1, %1 : vector<64x8xf32>
    %c0_2 = arith.constant 0 : index
    %c0_3 = arith.constant 0 : index
    %c0_4 = arith.constant 0 : index
    %3 = vector.load %arg3[%c0_2, %c0_3, %c0_4] : memref<1x8x128xf32, #tpu.memory_space<vmem>>, vector<1x8x128xf32>
    %4 = vector.shape_cast %3 : vector<1x8x128xf32> to vector<8x128xf32>
    %cst = arith.constant dense<0.000000e+00> : vector<64x128xf32>
    %5 = tpu.matmul %2, %4, %cst {dimension_numbers = #tpu.dot_dimension_numbers<[1], [0], [0], [1], [0, 0, 1, 1], [], []>, precision = #tpu.contract_precision<fp32>} : vector<64x8xf32>, vector<8x128xf32>, vector<64x128xf32> -> vector<64x128xf32>
    %c0_5 = arith.constant 0 : index
    %c0_6 = arith.constant 0 : index
    %c0_7 = arith.constant 0 : index
    %6 = vector.load %arg4[%c0_5, %c0_6, %c0_7] : memref<1x8x128xf32, #tpu.memory_space<vmem>>, vector<1x8x128xf32>
    %7 = vector.shape_cast %6 : vector<1x8x128xf32> to vector<8x128xf32>
    %cst_8 = arith.constant dense<0.000000e+00> : vector<64x128xf32>
    %8 = tpu.matmul %1, %7, %cst_8 {dimension_numbers = #tpu.dot_dimension_numbers<[1], [0], [0], [1], [0, 0, 1, 1], [], []>, precision = #tpu.contract_precision<fp32>} : vector<64x8xf32>, vector<8x128xf32>, vector<64x128xf32> -> vector<64x128xf32>
    %9 = arith.addf %5, %8 : vector<64x128xf32>
    %c0_9 = arith.constant 0 : index
    %c0_10 = arith.constant 0 : index
    %c0_11 = arith.constant 0 : index
    %10 = vector.load %arg6[%c0_9, %c0_10, %c0_11] : memref<1x1x128xf32, #tpu.memory_space<vmem>>, vector<1x1x128xf32>
    %11 = vector.shape_cast %10 : vector<1x1x128xf32> to vector<1x128xf32>
    %12 = vector.broadcast %11 : vector<1x128xf32> to vector<64x128xf32>
    %13 = arith.addf %9, %12 : vector<64x128xf32>
    %c0_12 = arith.constant 0 : index
    %c0_13 = arith.constant 0 : index
    %c0_14 = arith.constant 0 : index
    %14 = vector.load %arg5[%c0_12, %c0_13, %c0_14] : memref<1x8x128xf32, #tpu.memory_space<vmem>>, vector<1x8x128xf32>
    %15 = vector.shape_cast %14 : vector<1x8x128xf32> to vector<8x128xf32>
    %cst_15 = arith.constant dense<0.000000e+00> : vector<64x128xf32>
    %16 = tpu.matmul %1, %15, %cst_15 {dimension_numbers = #tpu.dot_dimension_numbers<[1], [0], [0], [1], [0, 0, 1, 1], [], []>, precision = #tpu.contract_precision<fp32>} : vector<64x8xf32>, vector<8x128xf32>, vector<64x128xf32> -> vector<64x128xf32>
    %c0_16 = arith.constant 0 : index
    %c0_17 = arith.constant 0 : index
    %c0_18 = arith.constant 0 : index
    %17 = vector.load %arg7[%c0_16, %c0_17, %c0_18] : memref<1x1x128xf32, #tpu.memory_space<vmem>>, vector<1x1x128xf32>
    %18 = vector.shape_cast %17 : vector<1x1x128xf32> to vector<1x128xf32>
    %19 = vector.broadcast %18 : vector<1x128xf32> to vector<64x128xf32>
    %20 = arith.addf %16, %19 : vector<64x128xf32>
    %cst_19 = arith.constant -5.000000e-01 : f32
    %21 = vector.broadcast %cst_19 : f32 to vector<64x128xf32>
    %22 = arith.mulf %21, %13 : vector<64x128xf32>
    %23 = math.exp %22 : vector<64x128xf32>
    %24 = math.sin %20 : vector<64x128xf32>
    %25 = arith.mulf %23, %24 : vector<64x128xf32>
    %c0_20 = arith.constant 0 : index
    %c0_21 = arith.constant 0 : index
    %c0_22 = arith.constant 0 : index
    %26 = vector.load %arg8[%c0_20, %c0_21, %c0_22] : memref<1x64x128xf32, #tpu.memory_space<vmem>>, vector<1x64x128xf32>
    %27 = vector.shape_cast %26 : vector<1x64x128xf32> to vector<64x128xf32>
    %28 = vector.shape_cast %25 : vector<64x128xf32> to vector<1x64x128xf32>
    tpu.vector_store %arg8[%c0_20, %c0_21, %c0_22], %28 {strides = array<i32>} : memref<1x64x128xf32, #tpu.memory_space<vmem>>, vector<1x64x128xf32>,
    return
  }
  func.func @transform_0(%arg0: i32, %arg1: i32) -> (i32, i32, i32) {
    %c0_i32 = arith.constant 0 : i32
    %c0_i32_0 = arith.constant 0 : i32
    return %arg0, %arg1, %c0_i32 : i32, i32, i32
  }
  func.func @transform_1(%arg0: i32, %arg1: i32) -> (i32, i32, i32) {
    %c0_i32 = arith.constant 0 : i32
    %c0_i32_0 = arith.constant 0 : i32
    %c0_i32_1 = arith.constant 0 : i32
    return %arg0, %c0_i32, %c0_i32_0 : i32, i32, i32
  }
  func.func @transform_2(%arg0: i32, %arg1: i32) -> (i32, i32, i32) {
    %c0_i32 = arith.constant 0 : i32
    %c0_i32_0 = arith.constant 0 : i32
    %c0_i32_1 = arith.constant 0 : i32
    return %arg0, %c0_i32, %c0_i32_0 : i32, i32, i32
  }
  func.func @transform_3(%arg0: i32, %arg1: i32) -> (i32, i32, i32) {
    %c0_i32 = arith.constant 0 : i32
    %c0_i32_0 = arith.constant 0 : i32
    %c0_i32_1 = arith.constant 0 : i32
    return %arg0, %c0_i32, %c0_i32_0 : i32, i32, i32
  }
  func.func @transform_4(%arg0: i32, %arg1: i32) -> (i32, i32, i32) {
    %c0_i32 = arith.constant 0 : i32
    %c0_i32_0 = arith.constant 0 : i32
    %c0_i32_1 = arith.constant 0 : i32
    return %arg0, %c0_i32, %c0_i32_0 : i32, i32, i32
  }
  func.func @transform_5(%arg0: i32, %arg1: i32) -> (i32, i32, i32) {
    %c0_i32 = arith.constant 0 : i32
    %c0_i32_0 = arith.constant 0 : i32
    %c0_i32_1 = arith.constant 0 : i32
    return %arg0, %c0_i32, %c0_i32_0 : i32, i32, i32
  }
  func.func @transform_6(%arg0: i32, %arg1: i32) -> (i32, i32, i32) {
    %c0_i32 = arith.constant 0 : i32
    %c0_i32_0 = arith.constant 0 : i32
    return %arg0, %arg1, %c0_i32 : i32, i32, i32
  }
}

</mosaic_0001>

<llo_original>
// kernel: tpu_custom_call.1
$region0: #{tpu_custom_call.1}
  #allocation0 [shape = 'u32[]', space=smem, size = 0x4, offset = 0x4, fixed_abs, tag = 'smem constant byte address 0x4 - core index']
  #allocation1 [shape = 'u32[72,128]{1,0:T(1,128)}', space=vmem, size = 0x9000, scoped, tag = 'internal scratch']
  %s0 = inlined_call_operand.vmem [shape: f32[2,64,8], index: 0, kind: input, shape index: {}]
  %s1 = inlined_call_operand.vmem [shape: f32[2,8,128], index: 1, kind: input, shape index: {}]
  %s2 = inlined_call_operand.vmem [shape: f32[2,8,128], index: 2, kind: input, shape index: {}]
  %s3 = inlined_call_operand.vmem [shape: f32[2,8,128], index: 3, kind: input, shape index: {}]
  %s4 = inlined_call_operand.vmem [shape: f32[2,1,128], index: 4, kind: input, shape index: {}]
  %s5 = inlined_call_operand.vmem [shape: f32[2,1,128], index: 5, kind: input, shape index: {}]
  %s6 = inlined_call_operand.hbm [shape: f32[2,64,128], index: 6, kind: output, shape index: {}]
  %s7 = sld [smem:[#allocation0]]
  $region57: #{tpu_custom_call.1} parent=0
    _
  %s9 = ssub.s32 1, %s7
  %s10 = scalar_select 0, %s9, %s7
  $region1: #{tpu_custom_call.1} parent=0
    #allocation2 [shape = 'u8[65536]{0}', space=vmem, size = 0x10000, scoped, tag = 'output window, operand 0']
    #allocation3 [shape = 's32[2]{0}', space=sflag, size = 0x8, scoped, tag = 'scoped memory for tpu_custom_call.1']
    %11 = vsyncpa [#allocation3], 0
    %s12 = scalar_lea.sflag [#allocation3], 1
    %13 = vsyncpa %s12, 0
    loop: start=0, step=1, limit=4
    $region2: #{tpu_custom_call.1} parent=1 // loop_pre_header
      _
    $region3: #{tpu_custom_call.1} parent=1 // loop_header
      %s15 = sphi 0, %s19
      %p16 = scmp.ge.s32.totalorder %s15, 4
      %s22 = sphi 0, %s34
      %s23 = sphi 0, %s30
      %s24 = sphi 0, %s22
      %s25 = sphi 0, %s23
      %s26 = sphi 0, %s24
      %s27 = sphi 0, %s25
      %s39 = sphi 0, %s41
      %s42 = sphi 0, %s39
      %s43 = sphi 0, %s42
      %s59 = sphi 0, %s43
      %s65 = sphi 0, %s67
      %s68 = sphi 0, %s65
      %s69 = sphi 0, %s68
      %s85 = sphi 0, %s69
      %s91 = sphi 0, %s93
      %s94 = sphi 0, %s91
      %s95 = sphi 0, %s94
      %s111 = sphi 0, %s95
      %s117 = sphi 0, %s119
      %s120 = sphi 0, %s117
      %s121 = sphi 0, %s120
      %s137 = sphi 0, %s121
      %s143 = sphi 0, %s145
      %s146 = sphi 0, %s143
      %s147 = sphi 0, %s146
      %s163 = sphi 0, %s147
      %s169 = sphi 0, %s171
      %s172 = sphi 0, %s169
      %s173 = sphi 0, %s172
      %s189 = sphi 0, %s173
      %s197 = sphi 0, %s199
      %s200 = sphi 0, %s197
      %s201 = sphi 0, %s200
      %s217 = sphi 0, %s201
    $region4: #{tpu_custom_call.1} parent=1 // loop_header_branch
      %18 = sbr.rel (%p16) target = $region8
    $region5: #{tpu_custom_call.1} parent=1 // loop_body
      %s20 = ssub.s32 %s15, 1
      %s21 = ssub.s32 %s15, 2
      %s28 = sadd.s32 1, %s23
      %p29 = scmp.ge.s32.totalorder %s28, 1
      %s30 = scalar_select %p29, 0, %s28
      %s31 = sadd.s32 1, %s22
      %s32 = scalar_select %p29, %s31, %s22
      %p33 = scmp.ge.s32.totalorder %s32, 2
      %s34 = scalar_select %p33, 0, %s32
      %s35 = ssub.s32 %s22, %s34
      %s36 = ssub.s32 %s23, %s30
      %s37 = sor.u32 %s35, %s36
      %p38 = scmp.eq.s32.totalorder %s37, 0
      %s40 = sadd.s32 %s39, 1
      %s41 = scalar_select %p38, %s39, %s40
      %p44 = pneg %p38
      %p45 = scmp.eq.s32.totalorder %s15, 1
      %p46 = por %p44, %p45
      %p47 = scmp.ne.s32.totalorder %s39, %s42
      %p48 = scmp.eq.s32.totalorder %s15, 0
      %p49 = por %p47, %p48
      %p50 = scmp.ne.s32.totalorder %s39, %s42
      %p51 = scmp.eq.s32.totalorder %s20, 1
      %p52 = por %p50, %p51
      %p53 = scmp.ne.s32.totalorder %s42, %s43
      %p54 = scmp.eq.s32.totalorder %s20, 0
      %p55 = por %p53, %p54
      %p56 = scmp.ne.s32.totalorder %s42, %s43
      %p57 = scmp.eq.s32.totalorder %s21, 1
      %p58 = por %p56, %p57
      %p60 = scmp.ne.s32.totalorder %s43, %s59
      %p61 = scmp.eq.s32.totalorder %s21, 0
      %p62 = por %p60, %p61
      %s63 = ssub.s32 %s22, %s34
      %p64 = scmp.eq.s32.totalorder %s63, 0
      %s66 = sadd.s32 %s65, 1
      %s67 = scalar_select %p64, %s65, %s66
      %p70 = pneg %p64
      %p71 = scmp.eq.s32.totalorder %s15, 1
      %p72 = por %p70, %p71
      %p73 = scmp.ne.s32.totalorder %s65, %s68
      %p74 = scmp.eq.s32.totalorder %s15, 0
      %p75 = por %p73, %p74
      %p76 = scmp.ne.s32.totalorder %s65, %s68
      %p77 = scmp.eq.s32.totalorder %s20, 1
      %p78 = por %p76, %p77
      %p79 = scmp.ne.s32.totalorder %s68, %s69
      %p80 = scmp.eq.s32.totalorder %s20, 0
      %p81 = por %p79, %p80
      %p82 = scmp.ne.s32.totalorder %s68, %s69
      %p83 = scmp.eq.s32.totalorder %s21, 1
      %p84 = por %p82, %p83
      %p86 = scmp.ne.s32.totalorder %s69, %s85
      %p87 = scmp.eq.s32.totalorder %s21, 0
      %p88 = por %p86, %p87
      %s89 = ssub.s32 %s22, %s34
      %p90 = scmp.eq.s32.totalorder %s89, 0
      %s92 = sadd.s32 %s91, 1
      %s93 = scalar_select %p90, %s91, %s92
      %p96 = pneg %p90
      %p97 = scmp.eq.s32.totalorder %s15, 1
      %p98 = por %p96, %p97
      %p99 = scmp.ne.s32.totalorder %s91, %s94
      %p100 = scmp.eq.s32.totalorder %s15, 0
      %p101 = por %p99, %p100
      %p102 = scmp.ne.s32.totalorder %s91, %s94
      %p103 = scmp.eq.s32.totalorder %s20, 1
      %p104 = por %p102, %p103
      %p105 = scmp.ne.s32.totalorder %s94, %s95
      %p106 = scmp.eq.s32.totalorder %s20, 0
      %p107 = por %p105, %p106
      %p108 = scmp.ne.s32.totalorder %s94, %s95
      %p109 = scmp.eq.s32.totalorder %s21, 1
      %p110 = por %p108, %p109
      %p112 = scmp.ne.s32.totalorder %s95, %s111
      %p113 = scmp.eq.s32.totalorder %s21, 0
      %p114 = por %p112, %p113
      %s115 = ssub.s32 %s22, %s34
      %p116 = scmp.eq.s32.totalorder %s115, 0
      %s118 = sadd.s32 %s117, 1
      %s119 = scalar_select %p116, %s117, %s118
      %p122 = pneg %p116
      %p123 = scmp.eq.s32.totalorder %s15, 1
      %p124 = por %p122, %p123
      %p125 = scmp.ne.s32.totalorder %s117, %s120
      %p126 = scmp.eq.s32.totalorder %s15, 0
      %p127 = por %p125, %p126
      %p128 = scmp.ne.s32.totalorder %s117, %s120
      %p129 = scmp.eq.s32.totalorder %s20, 1
      %p130 = por %p128, %p129
      %p131 = scmp.ne.s32.totalorder %s120, %s121
      %p132 = scmp.eq.s32.totalorder %s20, 0
      %p133 = por %p131, %p132
      %p134 = scmp.ne.s32.totalorder %s120, %s121
      %p135 = scmp.eq.s32.totalorder %s21, 1
      %p136 = por %p134, %p135
      %p138 = scmp.ne.s32.totalorder %s121, %s137
      %p139 = scmp.eq.s32.totalorder %s21, 0
      %p140 = por %p138, %p139
      %s141 = ssub.s32 %s22, %s34
      %p142 = scmp.eq.s32.totalorder %s141, 0
      %s144 = sadd.s32 %s143, 1
      %s145 = scalar_select %p142, %s143, %s144
      %p148 = pneg %p142
      %p149 = scmp.eq.s32.totalorder %s15, 1
      %p150 = por %p148, %p149
      %p151 = scmp.ne.s32.totalorder %s143, %s146
      %p152 = scmp.eq.s32.totalorder %s15, 0
      %p153 = por %p151, %p152
      %p154 = scmp.ne.s32.totalorder %s143, %s146
      %p155 = scmp.eq.s32.totalorder %s20, 1
      %p156 = por %p154, %p155
      %p157 = scmp.ne.s32.totalorder %s146, %s147
      %p158 = scmp.eq.s32.totalorder %s20, 0
      %p159 = por %p157, %p158
      %p160 = scmp.ne.s32.totalorder %s146, %s147
      %p161 = scmp.eq.s32.totalorder %s21, 1
      %p162 = por %p160, %p161
      %p164 = scmp.ne.s32.totalorder %s147, %s163
      %p165 = scmp.eq.s32.totalorder %s21, 0
      %p166 = por %p164, %p165
      %s167 = ssub.s32 %s22, %s34
      %p168 = scmp.eq.s32.totalorder %s167, 0
      %s170 = sadd.s32 %s169, 1
      %s171 = scalar_select %p168, %s169, %s170
      %p174 = pneg %p168
      %p175 = scmp.eq.s32.totalorder %s15, 1
      %p176 = por %p174, %p175
      %p177 = scmp.ne.s32.totalorder %s169, %s172
      %p178 = scmp.eq.s32.totalorder %s15, 0
      %p179 = por %p177, %p178
      %p180 = scmp.ne.s32.totalorder %s169, %s172
      %p181 = scmp.eq.s32.totalorder %s20, 1
      %p182 = por %p180, %p181
      %p183 = scmp.ne.s32.totalorder %s172, %s173
      %p184 = scmp.eq.s32.totalorder %s20, 0
      %p185 = por %p183, %p184
      %p186 = scmp.ne.s32.totalorder %s172, %s173
      %p187 = scmp.eq.s32.totalorder %s21, 1
      %p188 = por %p186, %p187
      %p190 = scmp.ne.s32.totalorder %s173, %s189
      %p191 = scmp.eq.s32.totalorder %s21, 0
      %p192 = por %p190, %p191
      %s193 = ssub.s32 %s22, %s34
      %s194 = ssub.s32 %s23, %s30
      %s195 = sor.u32 %s193, %s194
      %p196 = scmp.eq.s32.totalorder %s195, 0
      %s198 = sadd.s32 %s197, 1
      %s199 = scalar_select %p196, %s197, %s198
      %p202 = pneg %p196
      %p203 = scmp.eq.s32.totalorder %s15, 1
      %p204 = por %p202, %p203
      %p205 = scmp.ne.s32.totalorder %s197, %s200
      %p206 = scmp.eq.s32.totalorder %s15, 0
      %p207 = por %p205, %p206
      %p208 = scmp.ne.s32.totalorder %s197, %s200
      %p209 = scmp.eq.s32.totalorder %s20, 1
      %p210 = por %p208, %p209
      %p211 = scmp.ne.s32.totalorder %s200, %s201
      %p212 = scmp.eq.s32.totalorder %s20, 0
      %p213 = por %p211, %p212
      %p214 = scmp.ne.s32.totalorder %s200, %s201
      %p215 = scmp.eq.s32.totalorder %s21, 1
      %p216 = por %p214, %p215
      %p218 = scmp.ne.s32.totalorder %s201, %s217
      %p219 = scmp.eq.s32.totalorder %s21, 0
      %p220 = por %p218, %p219
      %p221 = scmp.le.s32.totalorder 1, %s15
      %p222 = scmp.lt.s32.totalorder %s15, 3
      %p223 = pnand %p221, %p222
      %p224 = pneg %p223
      // Predicated region
      $region9: #{tpu_custom_call.1} parent=5 // pred_check
        _
      $region10: #{tpu_custom_call.1} parent=5 // pred_check_branch
        %226 = sbr.rel (%p223) target = $region12
      $region11: #{tpu_custom_call.1} parent=5 // pred_region
        %s227 = ssub.s32 %s15, 1
      $region12: #{tpu_custom_call.1} parent=5 // pred_fallthru
        _
      %p228 = scmp.lt.s32.totalorder %s15, 2
      // Predicated region
      $region13: #{tpu_custom_call.1} parent=5 // pred_check
        %p229 = pneg %p228
      $region14: #{tpu_custom_call.1} parent=5 // pred_check_branch
        %231 = sbr.rel (%p229) target = $region16
      $region15: #{tpu_custom_call.1} parent=5 // pred_region
        // Predicated region
        $region17: #{tpu_custom_call.1} parent=15 // pred_check
          %p232 = pneg %p49
        $region18: #{tpu_custom_call.1} parent=15 // pred_check_branch
          %234 = sbr.rel (%p232) target = $region20
        $region19: #{tpu_custom_call.1} parent=15 // pred_region
          %s235 = smul.u32 8, %s23
          %p236 = scmp.lt.s32.totalorder %s22, 1
          %s237 = scalar_select %p236, %s22, 1
          %p238 = scmp.lt.s32.totalorder %s235, 7
          %s239 = scalar_select %p238, %s235, 7
          %s240 = smul.addr %s237, 8
          %s241 = sadd.s32 %s239, %s240
          %s242 = smul.addr %s241, 8
          %s243 = scalar_lea.vmem %s0, %s242
          %s244 = smul.u32 8, %s23
        $region20: #{tpu_custom_call.1} parent=15 // pred_fallthru
          _
        // Predicated region
        $region21: #{tpu_custom_call.1} parent=15 // pred_check
          %p245 = pneg %p75
        $region22: #{tpu_custom_call.1} parent=15 // pred_check_branch
          %247 = sbr.rel (%p245) target = $region24
        $region23: #{tpu_custom_call.1} parent=15 // pred_region
          %p248 = scmp.lt.s32.totalorder %s22, 1
          %s249 = scalar_select %p248, %s22, 1
          %s250 = smul.addr %s249, 8
          %s251 = scalar_lea.vmem %s1, %s250
        $region24: #{tpu_custom_call.1} parent=15 // pred_fallthru
          _
        // Predicated region
        $region25: #{tpu_custom_call.1} parent=15 // pred_check
          %p252 = pneg %p101
        $region26: #{tpu_custom_call.1} parent=15 // pred_check_branch
          %254 = sbr.rel (%p252) target = $region28
        $region27: #{tpu_custom_call.1} parent=15 // pred_region
          %p255 = scmp.lt.s32.totalorder %s22, 1
          %s256 = scalar_select %p255, %s22, 1
          %s257 = smul.addr %s256, 8
          %s258 = scalar_lea.vmem %s2, %s257
        $region28: #{tpu_custom_call.1} parent=15 // pred_fallthru
          _
        // Predicated region
        $region29: #{tpu_custom_call.1} parent=15 // pred_check
          %p259 = pneg %p127
        $region30: #{tpu_custom_call.1} parent=15 // pred_check_branch
          %261 = sbr.rel (%p259) target = $region32
        $region31: #{tpu_custom_call.1} parent=15 // pred_region
          %p262 = scmp.lt.s32.totalorder %s22, 1
          %s263 = scalar_select %p262, %s22, 1
          %s264 = smul.addr %s263, 8
          %s265 = scalar_lea.vmem %s3, %s264
        $region32: #{tpu_custom_call.1} parent=15 // pred_fallthru
          _
        // Predicated region
        $region33: #{tpu_custom_call.1} parent=15 // pred_check
          %p266 = pneg %p153
        $region34: #{tpu_custom_call.1} parent=15 // pred_check_branch
          %268 = sbr.rel (%p266) target = $region36
        $region35: #{tpu_custom_call.1} parent=15 // pred_region
          %p269 = scmp.lt.s32.totalorder %s22, 1
          %s270 = scalar_select %p269, %s22, 1
          %s271 = scalar_lea.vmem %s4, %s270
        $region36: #{tpu_custom_call.1} parent=15 // pred_fallthru
          _
        // Predicated region
        $region37: #{tpu_custom_call.1} parent=15 // pred_check
          %p272 = pneg %p179
        $region38: #{tpu_custom_call.1} parent=15 // pred_check_branch
          %274 = sbr.rel (%p272) target = $region40
        $region39: #{tpu_custom_call.1} parent=15 // pred_region
          %p275 = scmp.lt.s32.totalorder %s22, 1
          %s276 = scalar_select %p275, %s22, 1
          %s277 = scalar_lea.vmem %s5, %s276
        $region40: #{tpu_custom_call.1} parent=15 // pred_fallthru
          _
      $region16: #{tpu_custom_call.1} parent=5 // pred_fallthru
        _
      %p278 = scmp.le.s32.totalorder 1, %s15
      %p279 = scmp.lt.s32.totalorder %s15, 3
      %p280 = pnand %p278, %p279
      %p281 = pneg %p280
      // Predicated region
      $region41: #{tpu_custom_call.1} parent=5 // pred_check
        _
      $region42: #{tpu_custom_call.1} parent=5 // pred_check_branch
        %283 = sbr.rel (%p280) target = $region44
      $region43: #{tpu_custom_call.1} parent=5 // pred_region
        %s284 = ssub.s32 %s15, 1
        %s285 = smul.u32 8, %s25
        %p286 = scmp.lt.s32.totalorder %s24, 1
        %s287 = scalar_select %p286, %s24, 1
        %p288 = scmp.lt.s32.totalorder %s285, 7
        %s289 = scalar_select %p288, %s285, 7
        %s290 = smul.addr %s287, 8
        %s291 = sadd.s32 %s289, %s290
        %s292 = smul.addr %s291, 8
        %s293 = scalar_lea.vmem %s0, %s292
        %p294 = pneg %p55
        %p295 = pneg %p52
        %p296 = scmp.lt.s32.totalorder %s24, 1
        %s297 = scalar_select %p296, %s24, 1
        %s298 = smul.addr %s297, 8
        %s299 = scalar_lea.vmem %s1, %s298
        %p300 = pneg %p81
        %p301 = pneg %p78
        %p302 = scmp.lt.s32.totalorder %s24, 1
        %s303 = scalar_select %p302, %s24, 1
        %s304 = smul.addr %s303, 8
        %s305 = scalar_lea.vmem %s2, %s304
        %p306 = pneg %p107
        %p307 = pneg %p104
        %p308 = scmp.lt.s32.totalorder %s24, 1
        %s309 = scalar_select %p308, %s24, 1
        %s310 = smul.addr %s309, 8
        %s311 = scalar_lea.vmem %s3, %s310
        %p312 = pneg %p133
        %p313 = pneg %p130
        %p314 = scmp.lt.s32.totalorder %s24, 1
        %s315 = scalar_select %p314, %s24, 1
        %s316 = scalar_lea.vmem %s4, %s315
        %p317 = pneg %p159
        %p318 = pneg %p156
        %p319 = scmp.lt.s32.totalorder %s24, 1
        %s320 = scalar_select %p319, %s24, 1
        %s321 = scalar_lea.vmem %s5, %s320
        %p322 = pneg %p185
        %p323 = pneg %p182
        %p324 = pneg %p213
        %p325 = pneg %p210
        %s326 = sand.u32 %s200, 1
        %s327 = scalar_lea.sflag [#allocation3], %s326
        %s328 = sand.u32 %s200, 1
        %s329 = smul.addr %s328, 64
        %s330 = scalar_lea.vmem [#allocation2], %s329
        %s331 = smul.u32 8, %s25
        %p332 = scmp.lt.s32.totalorder %s24, 1
        %s333 = scalar_select %p332, %s24, 1
        %p334 = scmp.lt.s32.totalorder %s331, 7
        %s335 = scalar_select %p334, %s331, 7
        %s336 = smul.addr %s333, 8
        %s337 = sadd.s32 %s335, %s336
        %s338 = smul.addr %s337, 8
        %s339 = scalar_lea.vmem %s0, %s338
        %s340 = smul.u32 8, %s25
        %p341 = scmp.lt.s32.totalorder %s24, 1
        %s342 = scalar_select %p341, %s24, 1
        %s343 = smul.addr %s342, 8
        %s344 = scalar_lea.vmem %s1, %s343
        %p345 = scmp.lt.s32.totalorder %s24, 1
        %s346 = scalar_select %p345, %s24, 1
        %s347 = smul.addr %s346, 8
        %s348 = scalar_lea.vmem %s2, %s347
        %p349 = scmp.lt.s32.totalorder %s24, 1
        %s350 = scalar_select %p349, %s24, 1
        %s351 = smul.addr %s350, 8
        %s352 = scalar_lea.vmem %s3, %s351
        %p353 = scmp.lt.s32.totalorder %s24, 1
        %s354 = scalar_select %p353, %s24, 1
        %s355 = scalar_lea.vmem %s4, %s354
        %p356 = scmp.lt.s32.totalorder %s24, 1
        %s357 = scalar_select %p356, %s24, 1
        %s358 = scalar_lea.vmem %s5, %s357
        %s359 = smul.u32 8, %s25
        %v360 = vld [vmem:[%s339] sm:$0xff]
        %v361 = vld [vmem:[%s339 + $0x8] sm:$0xff]
        %v362 = vld [vmem:[%s339 + $0x10] sm:$0xff]
        %v363 = vld [vmem:[%s339 + $0x18] sm:$0xff]
        %v364 = vld [vmem:[%s339 + $0x20] sm:$0xff]
        %v365 = vld [vmem:[%s339 + $0x28] sm:$0xff]
        %v366 = vld [vmem:[%s339 + $0x30] sm:$0xff]
        %v367 = vld [vmem:[%s339 + $0x38] sm:$0xff]
        %v368 = vmul.f32 %v360, %v360
        %v369 = vmul.f32 %v361, %v361
        %v370 = vmul.f32 %v362, %v362
        %v371 = vmul.f32 %v363, %v363
        %v372 = vmul.f32 %v364, %v364
        %v373 = vmul.f32 %v365, %v365
        %v374 = vmul.f32 %v366, %v366
        %v375 = vmul.f32 %v367, %v367
        %v376 = vld [vmem:[%s344] sm:$0xff]
        %v377 = vld [vmem:[%s348] sm:$0xff]
        %vm378 = vcmask 64512
        %v380 = vsel %vm378, %v360, 0
        %v383 = vsel %vm378, %v361, 0
        %v386 = vsel %vm378, %v362, 0
        %v389 = vsel %vm378, %v363, 0
        %v392 = vsel %vm378, %v364, 0
        %v395 = vsel %vm378, %v365, 0
        %v398 = vsel %vm378, %v366, 0
        %v401 = vsel %vm378, %v367, 0
        %403 = vmatpush.msra.mxu0 0.0
        %404 = vmatpush.msra.mxu0 0.0
        %405 = vmatpush.msra.mxu0 0.0
        %406 = vmatpush.msra.mxu0 0.0
        %407 = vmatpush.msra.mxu0 0.0
        %408 = vmatpush.msra.mxu0 0.0
        %409 = vmatpush.msra.mxu0 0.0
        %410 = vmatpush.msra.mxu0 0.0
        %411 = vmatpush.msra.mxu0 0.0
        %412 = vmatpush.msra.mxu0 0.0
        %413 = vmatpush.msra.mxu0 0.0
        %414 = vmatpush.msra.mxu0 0.0
        %415 = vmatpush.msra.mxu0 0.0
        %416 = vmatpush.msra.mxu0 0.0
        %417 = vmatpush.msra.mxu0 0.0
        %v418 = vand.u32 %v377, 4294901760
        %419 = vmatpush.msra.mxu0 %v418
        %v420 = vand.u32 %v380, 4294901760
        %v421 = vsub.f32 %v380, %v420
        %v422 = vand.u32 %v421, 4294901760
        %v423 = vsub.f32 %v421, %v422
        %v424 = vand.u32 %v423, 4294901760
        %425 = vmatmul.f32.gmra.mxu0 %v424
        %v426 = vpop.f32.mrf.mxu0
        %v427 = vadd.f32 0.0, %v426
        %v428 = vand.u32 %v383, 4294901760
        %v429 = vsub.f32 %v383, %v428
        %v430 = vand.u32 %v429, 4294901760
        %v431 = vsub.f32 %v429, %v430
        %v432 = vand.u32 %v431, 4294901760
        %433 = vmatmul.f32.gmra.mxu0 %v432
        %v434 = vpop.f32.mrf.mxu0
        %v435 = vadd.f32 0.0, %v434
        %v436 = vand.u32 %v386, 4294901760
        %v437 = vsub.f32 %v386, %v436
        %v438 = vand.u32 %v437, 4294901760
        %v439 = vsub.f32 %v437, %v438
        %v440 = vand.u32 %v439, 4294901760
        %441 = vmatmul.f32.gmra.mxu0 %v440
        %v442 = vpop.f32.mrf.mxu0
        %v443 = vadd.f32 0.0, %v442
        %v444 = vand.u32 %v389, 4294901760
        %v445 = vsub.f32 %v389, %v444
        %v446 = vand.u32 %v445, 4294901760
        %v447 = vsub.f32 %v445, %v446
        %v448 = vand.u32 %v447, 4294901760
        %449 = vmatmul.f32.gmra.mxu0 %v448
        %v450 = vpop.f32.mrf.mxu0
        %v451 = vadd.f32 0.0, %v450
        %v452 = vand.u32 %v392, 4294901760
        %v453 = vsub.f32 %v392, %v452
        %v454 = vand.u32 %v453, 4294901760
        %v455 = vsub.f32 %v453, %v454
        %v456 = vand.u32 %v455, 4294901760
        %457 = vmatmul.f32.gmra.mxu0 %v456
        %v458 = vpop.f32.mrf.mxu0
        %v459 = vadd.f32 0.0, %v458
        %v460 = vand.u32 %v395, 4294901760
        %v461 = vsub.f32 %v395, %v460
        %v462 = vand.u32 %v461, 4294901760
        %v463 = vsub.f32 %v461, %v462
        %v464 = vand.u32 %v463, 4294901760
        %465 = vmatmul.f32.gmra.mxu0 %v464
        %v466 = vpop.f32.mrf.mxu0
        %v467 = vadd.f32 0.0, %v466
        %v468 = vand.u32 %v398, 4294901760
        %v469 = vsub.f32 %v398, %v468
        %v470 = vand.u32 %v469, 4294901760
        %v471 = vsub.f32 %v469, %v470
        %v472 = vand.u32 %v471, 4294901760
        %473 = vmatmul.f32.gmra.mxu0 %v472
        %v474 = vpop.f32.mrf.mxu0
        %v475 = vadd.f32 0.0, %v474
        %v476 = vand.u32 %v401, 4294901760
        %v477 = vsub.f32 %v401, %v476
        %v478 = vand.u32 %v477, 4294901760
        %v479 = vsub.f32 %v477, %v478
        %v480 = vand.u32 %v479, 4294901760
        %481 = vmatmul.f32.gmra.mxu0 %v480
        %v482 = vpop.f32.mrf.mxu0
        %v483 = vadd.f32 0.0, %v482
        %484 = vdwg.mxu0
        %485 = vmatpush.msra.mxu0 0.0
        %486 = vmatpush.msra.mxu0 0.0
        %487 = vmatpush.msra.mxu0 0.0
        %488 = vmatpush.msra.mxu0 0.0
        %489 = vmatpush.msra.mxu0 0.0
        %490 = vmatpush.msra.mxu0 0.0
        %491 = vmatpush.msra.mxu0 0.0
        %492 = vmatpush.msra.mxu0 0.0
        %493 = vmatpush.msra.mxu0 0.0
        %494 = vmatpush.msra.mxu0 0.0
        %495 = vmatpush.msra.mxu0 0.0
        %496 = vmatpush.msra.mxu0 0.0
        %497 = vmatpush.msra.mxu0 0.0
        %498 = vmatpush.msra.mxu0 0.0
        %499 = vmatpush.msra.mxu0 0.0
        %v500 = vand.u32 %v377, 4294901760
        %v501 = vsub.f32 %v377, %v500
        %v502 = vand.u32 %v501, 4294901760
        %v503 = vsub.f32 %v501, %v502
        %v504 = vand.u32 %v503, 4294901760
        %505 = vmatpush.msra.mxu0 %v504
        %v506 = vand.u32 %v380, 4294901760
        %507 = vmatmul.f32.gmra.mxu0 %v506
        %v508 = vpop.f32.mrf.mxu0
        %v509 = vadd.f32 %v427, %v508
        %v510 = vand.u32 %v383, 4294901760
        %511 = vmatmul.f32.gmra.mxu0 %v510
        %v512 = vpop.f32.mrf.mxu0
        %v513 = vadd.f32 %v435, %v512
        %v514 = vand.u32 %v386, 4294901760
        %515 = vmatmul.f32.gmra.mxu0 %v514
        %v516 = vpop.f32.mrf.mxu0
        %v517 = vadd.f32 %v443, %v516
        %v518 = vand.u32 %v389, 4294901760
        %519 = vmatmul.f32.gmra.mxu0 %v518
        %v520 = vpop.f32.mrf.mxu0
        %v521 = vadd.f32 %v451, %v520
        %v522 = vand.u32 %v392, 4294901760
        %523 = vmatmul.f32.gmra.mxu0 %v522
        %v524 = vpop.f32.mrf.mxu0
        %v525 = vadd.f32 %v459, %v524
        %v526 = vand.u32 %v395, 4294901760
        %527 = vmatmul.f32.gmra.mxu0 %v526
        %v528 = vpop.f32.mrf.mxu0
        %v529 = vadd.f32 %v467, %v528
        %v530 = vand.u32 %v398, 4294901760
        %531 = vmatmul.f32.gmra.mxu0 %v530
        %v532 = vpop.f32.mrf.mxu0
        %v533 = vadd.f32 %v475, %v532
        %v534 = vand.u32 %v401, 4294901760
        %535 = vmatmul.f32.gmra.mxu0 %v534
        %v536 = vpop.f32.mrf.mxu0
        %v537 = vadd.f32 %v483, %v536
        %538 = vdwg.mxu0
        %539 = vmatpush.msra.mxu0 0.0
        %540 = vmatpush.msra.mxu0 0.0
        %541 = vmatpush.msra.mxu0 0.0
        %542 = vmatpush.msra.mxu0 0.0
        %543 = vmatpush.msra.mxu0 0.0
        %544 = vmatpush.msra.mxu0 0.0
        %545 = vmatpush.msra.mxu0 0.0
        %546 = vmatpush.msra.mxu0 0.0
        %547 = vmatpush.msra.mxu0 0.0
        %548 = vmatpush.msra.mxu0 0.0
        %549 = vmatpush.msra.mxu0 0.0
        %550 = vmatpush.msra.mxu0 0.0
        %551 = vmatpush.msra.mxu0 0.0
        %552 = vmatpush.msra.mxu0 0.0
        %553 = vmatpush.msra.mxu0 0.0
        %v554 = vand.u32 %v377, 4294901760
        %v555 = vsub.f32 %v377, %v554
        %556 = vmatpush.msra.mxu0 %v555
        %v557 = vand.u32 %v380, 4294901760
        %v558 = vsub.f32 %v380, %v557
        %559 = vmatmul.f32.gmra.mxu0 %v558
        %v560 = vpop.f32.mrf.mxu0
        %v561 = vadd.f32 %v509, %v560
        %v562 = vand.u32 %v383, 4294901760
        %v563 = vsub.f32 %v383, %v562
        %564 = vmatmul.f32.gmra.mxu0 %v563
        %v565 = vpop.f32.mrf.mxu0
        %v566 = vadd.f32 %v513, %v565
        %v567 = vand.u32 %v386, 4294901760
        %v568 = vsub.f32 %v386, %v567
        %569 = vmatmul.f32.gmra.mxu0 %v568
        %v570 = vpop.f32.mrf.mxu0
        %v571 = vadd.f32 %v517, %v570
        %v572 = vand.u32 %v389, 4294901760
        %v573 = vsub.f32 %v389, %v572
        %574 = vmatmul.f32.gmra.mxu0 %v573
        %v575 = vpop.f32.mrf.mxu0
        %v576 = vadd.f32 %v521, %v575
        %v577 = vand.u32 %v392, 4294901760
        %v578 = vsub.f32 %v392, %v577
        %579 = vmatmul.f32.gmra.mxu0 %v578
        %v580 = vpop.f32.mrf.mxu0
        %v581 = vadd.f32 %v525, %v580
        %v582 = vand.u32 %v395, 4294901760
        %v583 = vsub.f32 %v395, %v582
        %584 = vmatmul.f32.gmra.mxu0 %v583
        %v585 = vpop.f32.mrf.mxu0
        %v586 = vadd.f32 %v529, %v585
        %v587 = vand.u32 %v398, 4294901760
        %v588 = vsub.f32 %v398, %v587
        %589 = vmatmul.f32.gmra.mxu0 %v588
        %v590 = vpop.f32.mrf.mxu0
        %v591 = vadd.f32 %v533, %v590
        %v592 = vand.u32 %v401, 4294901760
        %v593 = vsub.f32 %v401, %v592
        %594 = vmatmul.f32.gmra.mxu0 %v593
        %v595 = vpop.f32.mrf.mxu0
        %v596 = vadd.f32 %v537, %v595
        %597 = vdwg.mxu0
        %598 = vmatpush.msra.mxu0 0.0
        %599 = vmatpush.msra.mxu0 0.0
        %600 = vmatpush.msra.mxu0 0.0
        %601 = vmatpush.msra.mxu0 0.0
        %602 = vmatpush.msra.mxu0 0.0
        %603 = vmatpush.msra.mxu0 0.0
        %604 = vmatpush.msra.mxu0 0.0
        %605 = vmatpush.msra.mxu0 0.0
        %606 = vmatpush.msra.mxu0 0.0
        %607 = vmatpush.msra.mxu0 0.0
        %608 = vmatpush.msra.mxu0 0.0
        %609 = vmatpush.msra.mxu0 0.0
        %610 = vmatpush.msra.mxu0 0.0
        %611 = vmatpush.msra.mxu0 0.0
        %612 = vmatpush.msra.mxu0 0.0
        %v613 = vand.u32 %v377, 4294901760
        %614 = vmatpush.msra.mxu0 %v613
        %v615 = vand.u32 %v380, 4294901760
        %v616 = vsub.f32 %v380, %v615
        %v617 = vand.u32 %v616, 4294901760
        %618 = vmatmul.f32.gmra.mxu0 %v617
        %v619 = vpop.f32.mrf.mxu0
        %v620 = vadd.f32 %v561, %v619
        %v621 = vand.u32 %v383, 4294901760
        %v622 = vsub.f32 %v383, %v621
        %v623 = vand.u32 %v622, 4294901760
        %624 = vmatmul.f32.gmra.mxu0 %v623
        %v625 = vpop.f32.mrf.mxu0
        %v626 = vadd.f32 %v566, %v625
        %v627 = vand.u32 %v386, 4294901760
        %v628 = vsub.f32 %v386, %v627
        %v629 = vand.u32 %v628, 4294901760
        %630 = vmatmul.f32.gmra.mxu0 %v629
        %v631 = vpop.f32.mrf.mxu0
        %v632 = vadd.f32 %v571, %v631
        %v633 = vand.u32 %v389, 4294901760
        %v634 = vsub.f32 %v389, %v633
        %v635 = vand.u32 %v634, 4294901760
        %636 = vmatmul.f32.gmra.mxu0 %v635
        %v637 = vpop.f32.mrf.mxu0
        %v638 = vadd.f32 %v576, %v637
        %v639 = vand.u32 %v392, 4294901760
        %v640 = vsub.f32 %v392, %v639
        %v641 = vand.u32 %v640, 4294901760
        %642 = vmatmul.f32.gmra.mxu0 %v641
        %v643 = vpop.f32.mrf.mxu0
        %v644 = vadd.f32 %v581, %v643
        %v645 = vand.u32 %v395, 4294901760
        %v646 = vsub.f32 %v395, %v645
        %v647 = vand.u32 %v646, 4294901760
        %648 = vmatmul.f32.gmra.mxu0 %v647
        %v649 = vpop.f32.mrf.mxu0
        %v650 = vadd.f32 %v586, %v649
        %v651 = vand.u32 %v398, 4294901760
        %v652 = vsub.f32 %v398, %v651
        %v653 = vand.u32 %v652, 4294901760
        %654 = vmatmul.f32.gmra.mxu0 %v653
        %v655 = vpop.f32.mrf.mxu0
        %v656 = vadd.f32 %v591, %v655
        %v657 = vand.u32 %v401, 4294901760
        %v658 = vsub.f32 %v401, %v657
        %v659 = vand.u32 %v658, 4294901760
        %660 = vmatmul.f32.gmra.mxu0 %v659
        %v661 = vpop.f32.mrf.mxu0
        %v662 = vadd.f32 %v596, %v661
        %663 = vdwg.mxu0
        %664 = vmatpush.msra.mxu0 0.0
        %665 = vmatpush.msra.mxu0 0.0
        %666 = vmatpush.msra.mxu0 0.0
        %667 = vmatpush.msra.mxu0 0.0
        %668 = vmatpush.msra.mxu0 0.0
        %669 = vmatpush.msra.mxu0 0.0
        %670 = vmatpush.msra.mxu0 0.0
        %671 = vmatpush.msra.mxu0 0.0
        %672 = vmatpush.msra.mxu0 0.0
        %673 = vmatpush.msra.mxu0 0.0
        %674 = vmatpush.msra.mxu0 0.0
        %675 = vmatpush.msra.mxu0 0.0
        %676 = vmatpush.msra.mxu0 0.0
        %677 = vmatpush.msra.mxu0 0.0
        %678 = vmatpush.msra.mxu0 0.0
        %v679 = vand.u32 %v377, 4294901760
        %v680 = vsub.f32 %v377, %v679
        %v681 = vand.u32 %v680, 4294901760
        %682 = vmatpush.msra.mxu0 %v681
        %v683 = vand.u32 %v380, 4294901760
        %684 = vmatmul.f32.gmra.mxu0 %v683
        %v685 = vpop.f32.mrf.mxu0
        %v686 = vadd.f32 %v620, %v685
        %v687 = vand.u32 %v383, 4294901760
        %688 = vmatmul.f32.gmra.mxu0 %v687
        %v689 = vpop.f32.mrf.mxu0
        %v690 = vadd.f32 %v626, %v689
        %v691 = vand.u32 %v386, 4294901760
        %692 = vmatmul.f32.gmra.mxu0 %v691
        %v693 = vpop.f32.mrf.mxu0
        %v694 = vadd.f32 %v632, %v693
        %v695 = vand.u32 %v389, 4294901760
        %696 = vmatmul.f32.gmra.mxu0 %v695
        %v697 = vpop.f32.mrf.mxu0
        %v698 = vadd.f32 %v638, %v697
        %v699 = vand.u32 %v392, 4294901760
        %700 = vmatmul.f32.gmra.mxu0 %v699
        %v701 = vpop.f32.mrf.mxu0
        %v702 = vadd.f32 %v644, %v701
        %v703 = vand.u32 %v395, 4294901760
        %704 = vmatmul.f32.gmra.mxu0 %v703
        %v705 = vpop.f32.mrf.mxu0
        %v706 = vadd.f32 %v650, %v705
        %v707 = vand.u32 %v398, 4294901760
        %708 = vmatmul.f32.gmra.mxu0 %v707
        %v709 = vpop.f32.mrf.mxu0
        %v710 = vadd.f32 %v656, %v709
        %v711 = vand.u32 %v401, 4294901760
        %712 = vmatmul.f32.gmra.mxu0 %v711
        %v713 = vpop.f32.mrf.mxu0
        %v714 = vadd.f32 %v662, %v713
        %715 = vdwg.mxu0
        %716 = vmatpush.msra.mxu0 0.0
        %717 = vmatpush.msra.mxu0 0.0
        %718 = vmatpush.msra.mxu0 0.0
        %719 = vmatpush.msra.mxu0 0.0
        %720 = vmatpush.msra.mxu0 0.0
        %721 = vmatpush.msra.mxu0 0.0
        %722 = vmatpush.msra.mxu0 0.0
        %723 = vmatpush.msra.mxu0 0.0
        %724 = vmatpush.msra.mxu0 0.0
        %725 = vmatpush.msra.mxu0 0.0
        %726 = vmatpush.msra.mxu0 0.0
        %727 = vmatpush.msra.mxu0 0.0
        %728 = vmatpush.msra.mxu0 0.0
        %729 = vmatpush.msra.mxu0 0.0
        %730 = vmatpush.msra.mxu0 0.0
        %v731 = vand.u32 %v377, 4294901760
        %732 = vmatpush.msra.mxu0 %v731
        %v733 = vand.u32 %v380, 4294901760
        %734 = vmatmul.f32.gmra.mxu0 %v733
        %v735 = vpop.f32.mrf.mxu0
        %v736 = vadd.f32 %v686, %v735
        %v737 = vand.u32 %v383, 4294901760
        %738 = vmatmul.f32.gmra.mxu0 %v737
        %v739 = vpop.f32.mrf.mxu0
        %v740 = vadd.f32 %v690, %v739
        %v741 = vand.u32 %v386, 4294901760
        %742 = vmatmul.f32.gmra.mxu0 %v741
        %v743 = vpop.f32.mrf.mxu0
        %v744 = vadd.f32 %v694, %v743
        %v745 = vand.u32 %v389, 4294901760
        %746 = vmatmul.f32.gmra.mxu0 %v745
        %v747 = vpop.f32.mrf.mxu0
        %v748 = vadd.f32 %v698, %v747
        %v749 = vand.u32 %v392, 4294901760
        %750 = vmatmul.f32.gmra.mxu0 %v749
        %v751 = vpop.f32.mrf.mxu0
        %v752 = vadd.f32 %v702, %v751
        %v753 = vand.u32 %v395, 4294901760
        %754 = vmatmul.f32.gmra.mxu0 %v753
        %v755 = vpop.f32.mrf.mxu0
        %v756 = vadd.f32 %v706, %v755
        %v757 = vand.u32 %v398, 4294901760
        %758 = vmatmul.f32.gmra.mxu0 %v757
        %v759 = vpop.f32.mrf.mxu0
        %v760 = vadd.f32 %v710, %v759
        %v761 = vand.u32 %v401, 4294901760
        %762 = vmatmul.f32.gmra.mxu0 %v761
        %v763 = vpop.f32.mrf.mxu0
        %v764 = vadd.f32 %v714, %v763
        %765 = vdwg.mxu0
        %v767 = vsel %vm378, %v368, 0
        %v770 = vsel %vm378, %v369, 0
        %v773 = vsel %vm378, %v370, 0
        %v776 = vsel %vm378, %v371, 0
        %v779 = vsel %vm378, %v372, 0
        %v782 = vsel %vm378, %v373, 0
        %v785 = vsel %vm378, %v374, 0
        %v788 = vsel %vm378, %v375, 0
        %790 = vmatpush.msra.mxu0 0.0
        %791 = vmatpush.msra.mxu0 0.0
        %792 = vmatpush.msra.mxu0 0.0
        %793 = vmatpush.msra.mxu0 0.0
        %794 = vmatpush.msra.mxu0 0.0
        %795 = vmatpush.msra.mxu0 0.0
        %796 = vmatpush.msra.mxu0 0.0
        %797 = vmatpush.msra.mxu0 0.0
        %798 = vmatpush.msra.mxu0 0.0
        %799 = vmatpush.msra.mxu0 0.0
        %800 = vmatpush.msra.mxu0 0.0
        %801 = vmatpush.msra.mxu0 0.0
        %802 = vmatpush.msra.mxu0 0.0
        %803 = vmatpush.msra.mxu0 0.0
        %804 = vmatpush.msra.mxu0 0.0
        %v805 = vand.u32 %v376, 4294901760
        %806 = vmatpush.msra.mxu0 %v805
        %v807 = vand.u32 %v767, 4294901760
        %v808 = vsub.f32 %v767, %v807
        %v809 = vand.u32 %v808, 4294901760
        %v810 = vsub.f32 %v808, %v809
        %v811 = vand.u32 %v810, 4294901760
        %812 = vmatmul.f32.gmra.mxu0 %v811
        %v813 = vpop.f32.mrf.mxu0
        %v814 = vadd.f32 %v736, %v813
        %v815 = vand.u32 %v770, 4294901760
        %v816 = vsub.f32 %v770, %v815
        %v817 = vand.u32 %v816, 4294901760
        %v818 = vsub.f32 %v816, %v817
        %v819 = vand.u32 %v818, 4294901760
        %820 = vmatmul.f32.gmra.mxu0 %v819
        %v821 = vpop.f32.mrf.mxu0
        %v822 = vadd.f32 %v740, %v821
        %v823 = vand.u32 %v773, 4294901760
        %v824 = vsub.f32 %v773, %v823
        %v825 = vand.u32 %v824, 4294901760
        %v826 = vsub.f32 %v824, %v825
        %v827 = vand.u32 %v826, 4294901760
        %828 = vmatmul.f32.gmra.mxu0 %v827
        %v829 = vpop.f32.mrf.mxu0
        %v830 = vadd.f32 %v744, %v829
        %v831 = vand.u32 %v776, 4294901760
        %v832 = vsub.f32 %v776, %v831
        %v833 = vand.u32 %v832, 4294901760
        %v834 = vsub.f32 %v832, %v833
        %v835 = vand.u32 %v834, 4294901760
        %836 = vmatmul.f32.gmra.mxu0 %v835
        %v837 = vpop.f32.mrf.mxu0
        %v838 = vadd.f32 %v748, %v837
        %v839 = vand.u32 %v779, 4294901760
        %v840 = vsub.f32 %v779, %v839
        %v841 = vand.u32 %v840, 4294901760
        %v842 = vsub.f32 %v840, %v841
        %v843 = vand.u32 %v842, 4294901760
        %844 = vmatmul.f32.gmra.mxu0 %v843
        %v845 = vpop.f32.mrf.mxu0
        %v846 = vadd.f32 %v752, %v845
        %v847 = vand.u32 %v782, 4294901760
        %v848 = vsub.f32 %v782, %v847
        %v849 = vand.u32 %v848, 4294901760
        %v850 = vsub.f32 %v848, %v849
        %v851 = vand.u32 %v850, 4294901760
        %852 = vmatmul.f32.gmra.mxu0 %v851
        %v853 = vpop.f32.mrf.mxu0
        %v854 = vadd.f32 %v756, %v853
        %v855 = vand.u32 %v785, 4294901760
        %v856 = vsub.f32 %v785, %v855
        %v857 = vand.u32 %v856, 4294901760
        %v858 = vsub.f32 %v856, %v857
        %v859 = vand.u32 %v858, 4294901760
        %860 = vmatmul.f32.gmra.mxu0 %v859
        %v861 = vpop.f32.mrf.mxu0
        %v862 = vadd.f32 %v760, %v861
        %v863 = vand.u32 %v788, 4294901760
        %v864 = vsub.f32 %v788, %v863
        %v865 = vand.u32 %v864, 4294901760
        %v866 = vsub.f32 %v864, %v865
        %v867 = vand.u32 %v866, 4294901760
        %868 = vmatmul.f32.gmra.mxu0 %v867
        %v869 = vpop.f32.mrf.mxu0
        %v870 = vadd.f32 %v764, %v869
        %871 = vdwg.mxu0
        %872 = vmatpush.msra.mxu0 0.0
        %873 = vmatpush.msra.mxu0 0.0
        %874 = vmatpush.msra.mxu0 0.0
        %875 = vmatpush.msra.mxu0 0.0
        %876 = vmatpush.msra.mxu0 0.0
        %877 = vmatpush.msra.mxu0 0.0
        %878 = vmatpush.msra.mxu0 0.0
        %879 = vmatpush.msra.mxu0 0.0
        %880 = vmatpush.msra.mxu0 0.0
        %881 = vmatpush.msra.mxu0 0.0
        %882 = vmatpush.msra.mxu0 0.0
        %883 = vmatpush.msra.mxu0 0.0
        %884 = vmatpush.msra.mxu0 0.0
        %885 = vmatpush.msra.mxu0 0.0
        %886 = vmatpush.msra.mxu0 0.0
        %v887 = vand.u32 %v376, 4294901760
        %v888 = vsub.f32 %v376, %v887
        %v889 = vand.u32 %v888, 4294901760
        %v890 = vsub.f32 %v888, %v889
        %v891 = vand.u32 %v890, 4294901760
        %892 = vmatpush.msra.mxu0 %v891
        %v893 = vand.u32 %v767, 4294901760
        %894 = vmatmul.f32.gmra.mxu0 %v893
        %v895 = vpop.f32.mrf.mxu0
        %v896 = vadd.f32 %v814, %v895
        %v897 = vand.u32 %v770, 4294901760
        %898 = vmatmul.f32.gmra.mxu0 %v897
        %v899 = vpop.f32.mrf.mxu0
        %v900 = vadd.f32 %v822, %v899
        %v901 = vand.u32 %v773, 4294901760
        %902 = vmatmul.f32.gmra.mxu0 %v901
        %v903 = vpop.f32.mrf.mxu0
        %v904 = vadd.f32 %v830, %v903
        %v905 = vand.u32 %v776, 4294901760
        %906 = vmatmul.f32.gmra.mxu0 %v905
        %v907 = vpop.f32.mrf.mxu0
        %v908 = vadd.f32 %v838, %v907
        %v909 = vand.u32 %v779, 4294901760
        %910 = vmatmul.f32.gmra.mxu0 %v909
        %v911 = vpop.f32.mrf.mxu0
        %v912 = vadd.f32 %v846, %v911
        %v913 = vand.u32 %v782, 4294901760
        %914 = vmatmul.f32.gmra.mxu0 %v913
        %v915 = vpop.f32.mrf.mxu0
        %v916 = vadd.f32 %v854, %v915
        %v917 = vand.u32 %v785, 4294901760
        %918 = vmatmul.f32.gmra.mxu0 %v917
        %v919 = vpop.f32.mrf.mxu0
        %v920 = vadd.f32 %v862, %v919
        %v921 = vand.u32 %v788, 4294901760
        %922 = vmatmul.f32.gmra.mxu0 %v921
        %v923 = vpop.f32.mrf.mxu0
        %v924 = vadd.f32 %v870, %v923
        %925 = vdwg.mxu0
        %926 = vmatpush.msra.mxu0 0.0
        %927 = vmatpush.msra.mxu0 0.0
        %928 = vmatpush.msra.mxu0 0.0
        %929 = vmatpush.msra.mxu0 0.0
        %930 = vmatpush.msra.mxu0 0.0
        %931 = vmatpush.msra.mxu0 0.0
        %932 = vmatpush.msra.mxu0 0.0
        %933 = vmatpush.msra.mxu0 0.0
        %934 = vmatpush.msra.mxu0 0.0
        %935 = vmatpush.msra.mxu0 0.0
        %936 = vmatpush.msra.mxu0 0.0
        %937 = vmatpush.msra.mxu0 0.0
        %938 = vmatpush.msra.mxu0 0.0
        %939 = vmatpush.msra.mxu0 0.0
        %940 = vmatpush.msra.mxu0 0.0
        %v941 = vand.u32 %v376, 4294901760
        %v942 = vsub.f32 %v376, %v941
        %943 = vmatpush.msra.mxu0 %v942
        %v944 = vand.u32 %v767, 4294901760
        %v945 = vsub.f32 %v767, %v944
        %946 = vmatmul.f32.gmra.mxu0 %v945
        %v947 = vpop.f32.mrf.mxu0
        %v948 = vadd.f32 %v896, %v947
        %v949 = vand.u32 %v770, 4294901760
        %v950 = vsub.f32 %v770, %v949
        %951 = vmatmul.f32.gmra.mxu0 %v950
        %v952 = vpop.f32.mrf.mxu0
        %v953 = vadd.f32 %v900, %v952
        %v954 = vand.u32 %v773, 4294901760
        %v955 = vsub.f32 %v773, %v954
        %956 = vmatmul.f32.gmra.mxu0 %v955
        %v957 = vpop.f32.mrf.mxu0
        %v958 = vadd.f32 %v904, %v957
        %v959 = vand.u32 %v776, 4294901760
        %v960 = vsub.f32 %v776, %v959
        %961 = vmatmul.f32.gmra.mxu0 %v960
        %v962 = vpop.f32.mrf.mxu0
        %v963 = vadd.f32 %v908, %v962
        %v964 = vand.u32 %v779, 4294901760
        %v965 = vsub.f32 %v779, %v964
        %966 = vmatmul.f32.gmra.mxu0 %v965
        %v967 = vpop.f32.mrf.mxu0
        %v968 = vadd.f32 %v912, %v967
        %v969 = vand.u32 %v782, 4294901760
        %v970 = vsub.f32 %v782, %v969
        %971 = vmatmul.f32.gmra.mxu0 %v970
        %v972 = vpop.f32.mrf.mxu0
        %v973 = vadd.f32 %v916, %v972
        %v974 = vand.u32 %v785, 4294901760
        %v975 = vsub.f32 %v785, %v974
        %976 = vmatmul.f32.gmra.mxu0 %v975
        %v977 = vpop.f32.mrf.mxu0
        %v978 = vadd.f32 %v920, %v977
        %v979 = vand.u32 %v788, 4294901760
        %v980 = vsub.f32 %v788, %v979
        %981 = vmatmul.f32.gmra.mxu0 %v980
        %v982 = vpop.f32.mrf.mxu0
        %v983 = vadd.f32 %v924, %v982
        %984 = vdwg.mxu0
        %985 = vmatpush.msra.mxu0 0.0
        %986 = vmatpush.msra.mxu0 0.0
        %987 = vmatpush.msra.mxu0 0.0
        %988 = vmatpush.msra.mxu0 0.0
        %989 = vmatpush.msra.mxu0 0.0
        %990 = vmatpush.msra.mxu0 0.0
        %991 = vmatpush.msra.mxu0 0.0
        %992 = vmatpush.msra.mxu0 0.0
        %993 = vmatpush.msra.mxu0 0.0
        %994 = vmatpush.msra.mxu0 0.0
        %995 = vmatpush.msra.mxu0 0.0
        %996 = vmatpush.msra.mxu0 0.0
        %997 = vmatpush.msra.mxu0 0.0
        %998 = vmatpush.msra.mxu0 0.0
        %999 = vmatpush.msra.mxu0 0.0
        %v1000 = vand.u32 %v376, 4294901760
        %1001 = vmatpush.msra.mxu0 %v1000
        %v1002 = vand.u32 %v767, 4294901760
        %v1003 = vsub.f32 %v767, %v1002
        %v1004 = vand.u32 %v1003, 4294901760
        %1005 = vmatmul.f32.gmra.mxu0 %v1004
        %v1006 = vpop.f32.mrf.mxu0
        %v1007 = vadd.f32 %v948, %v1006
        %v1008 = vand.u32 %v770, 4294901760
        %v1009 = vsub.f32 %v770, %v1008
        %v1010 = vand.u32 %v1009, 4294901760
        %1011 = vmatmul.f32.gmra.mxu0 %v1010
        %v1012 = vpop.f32.mrf.mxu0
        %v1013 = vadd.f32 %v953, %v1012
        %v1014 = vand.u32 %v773, 4294901760
        %v1015 = vsub.f32 %v773, %v1014
        %v1016 = vand.u32 %v1015, 4294901760
        %1017 = vmatmul.f32.gmra.mxu0 %v1016
        %v1018 = vpop.f32.mrf.mxu0
        %v1019 = vadd.f32 %v958, %v1018
        %v1020 = vand.u32 %v776, 4294901760
        %v1021 = vsub.f32 %v776, %v1020
        %v1022 = vand.u32 %v1021, 4294901760
        %1023 = vmatmul.f32.gmra.mxu0 %v1022
        %v1024 = vpop.f32.mrf.mxu0
        %v1025 = vadd.f32 %v963, %v1024
        %v1026 = vand.u32 %v779, 4294901760
        %v1027 = vsub.f32 %v779, %v1026
        %v1028 = vand.u32 %v1027, 4294901760
        %1029 = vmatmul.f32.gmra.mxu0 %v1028
        %v1030 = vpop.f32.mrf.mxu0
        %v1031 = vadd.f32 %v968, %v1030
        %v1032 = vand.u32 %v782, 4294901760
        %v1033 = vsub.f32 %v782, %v1032
        %v1034 = vand.u32 %v1033, 4294901760
        %1035 = vmatmul.f32.gmra.mxu0 %v1034
        %v1036 = vpop.f32.mrf.mxu0
        %v1037 = vadd.f32 %v973, %v1036
        %v1038 = vand.u32 %v785, 4294901760
        %v1039 = vsub.f32 %v785, %v1038
        %v1040 = vand.u32 %v1039, 4294901760
        %1041 = vmatmul.f32.gmra.mxu0 %v1040
        %v1042 = vpop.f32.mrf.mxu0
        %v1043 = vadd.f32 %v978, %v1042
        %v1044 = vand.u32 %v788, 4294901760
        %v1045 = vsub.f32 %v788, %v1044
        %v1046 = vand.u32 %v1045, 4294901760
        %1047 = vmatmul.f32.gmra.mxu0 %v1046
        %v1048 = vpop.f32.mrf.mxu0
        %v1049 = vadd.f32 %v983, %v1048
        %1050 = vdwg.mxu0
        %1051 = vmatpush.msra.mxu0 0.0
        %1052 = vmatpush.msra.mxu0 0.0
        %1053 = vmatpush.msra.mxu0 0.0
        %1054 = vmatpush.msra.mxu0 0.0
        %1055 = vmatpush.msra.mxu0 0.0
        %1056 = vmatpush.msra.mxu0 0.0
        %1057 = vmatpush.msra.mxu0 0.0
        %1058 = vmatpush.msra.mxu0 0.0
        %1059 = vmatpush.msra.mxu0 0.0
        %1060 = vmatpush.msra.mxu0 0.0
        %1061 = vmatpush.msra.mxu0 0.0
        %1062 = vmatpush.msra.mxu0 0.0
        %1063 = vmatpush.msra.mxu0 0.0
        %1064 = vmatpush.msra.mxu0 0.0
        %1065 = vmatpush.msra.mxu0 0.0
        %v1066 = vand.u32 %v376, 4294901760
        %v1067 = vsub.f32 %v376, %v1066
        %v1068 = vand.u32 %v1067, 4294901760
        %1069 = vmatpush.msra.mxu0 %v1068
        %v1070 = vand.u32 %v767, 4294901760
        %1071 = vmatmul.f32.gmra.mxu0 %v1070
        %v1072 = vpop.f32.mrf.mxu0
        %v1073 = vadd.f32 %v1007, %v1072
        %v1074 = vand.u32 %v770, 4294901760
        %1075 = vmatmul.f32.gmra.mxu0 %v1074
        %v1076 = vpop.f32.mrf.mxu0
        %v1077 = vadd.f32 %v1013, %v1076
        %v1078 = vand.u32 %v773, 4294901760
        %1079 = vmatmul.f32.gmra.mxu0 %v1078
        %v1080 = vpop.f32.mrf.mxu0
        %v1081 = vadd.f32 %v1019, %v1080
        %v1082 = vand.u32 %v776, 4294901760
        %1083 = vmatmul.f32.gmra.mxu0 %v1082
        %v1084 = vpop.f32.mrf.mxu0
        %v1085 = vadd.f32 %v1025, %v1084
        %v1086 = vand.u32 %v779, 4294901760
        %1087 = vmatmul.f32.gmra.mxu0 %v1086
        %v1088 = vpop.f32.mrf.mxu0
        %v1089 = vadd.f32 %v1031, %v1088
        %v1090 = vand.u32 %v782, 4294901760
        %1091 = vmatmul.f32.gmra.mxu0 %v1090
        %v1092 = vpop.f32.mrf.mxu0
        %v1093 = vadd.f32 %v1037, %v1092
        %v1094 = vand.u32 %v785, 4294901760
        %1095 = vmatmul.f32.gmra.mxu0 %v1094
        %v1096 = vpop.f32.mrf.mxu0
        %v1097 = vadd.f32 %v1043, %v1096
        %v1098 = vand.u32 %v788, 4294901760
        %1099 = vmatmul.f32.gmra.mxu0 %v1098
        %v1100 = vpop.f32.mrf.mxu0
        %v1101 = vadd.f32 %v1049, %v1100
        %1102 = vdwg.mxu0
        %1103 = vmatpush.msra.mxu0 0.0
        %1104 = vmatpush.msra.mxu0 0.0
        %1105 = vmatpush.msra.mxu0 0.0
        %1106 = vmatpush.msra.mxu0 0.0
        %1107 = vmatpush.msra.mxu0 0.0
        %1108 = vmatpush.msra.mxu0 0.0
        %1109 = vmatpush.msra.mxu0 0.0
        %1110 = vmatpush.msra.mxu0 0.0
        %1111 = vmatpush.msra.mxu0 0.0
        %1112 = vmatpush.msra.mxu0 0.0
        %1113 = vmatpush.msra.mxu0 0.0
        %1114 = vmatpush.msra.mxu0 0.0
        %1115 = vmatpush.msra.mxu0 0.0
        %1116 = vmatpush.msra.mxu0 0.0
        %1117 = vmatpush.msra.mxu0 0.0
        %v1118 = vand.u32 %v376, 4294901760
        %1119 = vmatpush.msra.mxu0 %v1118
        %v1120 = vand.u32 %v767, 4294901760
        %1121 = vmatmul.f32.gmra.mxu0 %v1120
        %v1122 = vpop.f32.mrf.mxu0
        %v1123 = vadd.f32 %v1073, %v1122
        %v1124 = vand.u32 %v770, 4294901760
        %1125 = vmatmul.f32.gmra.mxu0 %v1124
        %v1126 = vpop.f32.mrf.mxu0
        %v1127 = vadd.f32 %v1077, %v1126
        %v1128 = vand.u32 %v773, 4294901760
        %1129 = vmatmul.f32.gmra.mxu0 %v1128
        %v1130 = vpop.f32.mrf.mxu0
        %v1131 = vadd.f32 %v1081, %v1130
        %v1132 = vand.u32 %v776, 4294901760
        %1133 = vmatmul.f32.gmra.mxu0 %v1132
        %v1134 = vpop.f32.mrf.mxu0
        %v1135 = vadd.f32 %v1085, %v1134
        %v1136 = vand.u32 %v779, 4294901760
        %1137 = vmatmul.f32.gmra.mxu0 %v1136
        %v1138 = vpop.f32.mrf.mxu0
        %v1139 = vadd.f32 %v1089, %v1138
        %v1140 = vand.u32 %v782, 4294901760
        %1141 = vmatmul.f32.gmra.mxu0 %v1140
        %v1142 = vpop.f32.mrf.mxu0
        %v1143 = vadd.f32 %v1093, %v1142
        %v1144 = vand.u32 %v785, 4294901760
        %1145 = vmatmul.f32.gmra.mxu0 %v1144
        %v1146 = vpop.f32.mrf.mxu0
        %v1147 = vadd.f32 %v1097, %v1146
        %v1148 = vand.u32 %v788, 4294901760
        %1149 = vmatmul.f32.gmra.mxu0 %v1148
        %v1150 = vpop.f32.mrf.mxu0
        %v1151 = vadd.f32 %v1101, %v1150
        %1152 = vdwg.mxu0
        %v1153 = vld [vmem:[%s355] sm:$0x1]
        %v1155 = vperm.slane %v1153, 0
        %v1157 = vadd.f32 %v1123, %v1155
        %v1158 = vadd.f32 %v1127, %v1155
        %v1159 = vadd.f32 %v1131, %v1155
        %v1160 = vadd.f32 %v1135, %v1155
        %v1161 = vadd.f32 %v1139, %v1155
        %v1162 = vadd.f32 %v1143, %v1155
        %v1163 = vadd.f32 %v1147, %v1155
        %v1164 = vadd.f32 %v1151, %v1155
        %v1165 = vld [vmem:[%s352] sm:$0xff]
        %v1166 = vld [vmem:[%s358] sm:$0x1]
        %v1168 = vperm.slane %v1166, 0
        %1170 = vmatpush.msra.mxu0 0.0
        %1171 = vmatpush.msra.mxu0 0.0
        %1172 = vmatpush.msra.mxu0 0.0
        %1173 = vmatpush.msra.mxu0 0.0
        %1174 = vmatpush.msra.mxu0 0.0
        %1175 = vmatpush.msra.mxu0 0.0
        %1176 = vmatpush.msra.mxu0 0.0
        %1177 = vmatpush.msra.mxu0 0.0
        %1178 = vmatpush.msra.mxu0 0.0
        %1179 = vmatpush.msra.mxu0 0.0
        %1180 = vmatpush.msra.mxu0 0.0
        %1181 = vmatpush.msra.mxu0 0.0
        %1182 = vmatpush.msra.mxu0 0.0
        %1183 = vmatpush.msra.mxu0 0.0
        %1184 = vmatpush.msra.mxu0 0.0
        %v1185 = vand.u32 %v1165, 4294901760
        %1186 = vmatpush.msra.mxu0 %v1185
        %v1187 = vand.u32 %v380, 4294901760
        %v1188 = vsub.f32 %v380, %v1187
        %v1189 = vand.u32 %v1188, 4294901760
        %v1190 = vsub.f32 %v1188, %v1189
        %v1191 = vand.u32 %v1190, 4294901760
        %1192 = vmatmul.f32.gmra.mxu0 %v1191
        %v1193 = vpop.f32.mrf.mxu0
        %v1194 = vadd.f32 %v1168, %v1193
        %v1195 = vand.u32 %v383, 4294901760
        %v1196 = vsub.f32 %v383, %v1195
        %v1197 = vand.u32 %v1196, 4294901760
        %v1198 = vsub.f32 %v1196, %v1197
        %v1199 = vand.u32 %v1198, 4294901760
        %1200 = vmatmul.f32.gmra.mxu0 %v1199
        %v1201 = vpop.f32.mrf.mxu0
        %v1202 = vadd.f32 %v1168, %v1201
        %v1203 = vand.u32 %v386, 4294901760
        %v1204 = vsub.f32 %v386, %v1203
        %v1205 = vand.u32 %v1204, 4294901760
        %v1206 = vsub.f32 %v1204, %v1205
        %v1207 = vand.u32 %v1206, 4294901760
        %1208 = vmatmul.f32.gmra.mxu0 %v1207
        %v1209 = vpop.f32.mrf.mxu0
        %v1210 = vadd.f32 %v1168, %v1209
        %v1211 = vand.u32 %v389, 4294901760
        %v1212 = vsub.f32 %v389, %v1211
        %v1213 = vand.u32 %v1212, 4294901760
        %v1214 = vsub.f32 %v1212, %v1213
        %v1215 = vand.u32 %v1214, 4294901760
        %1216 = vmatmul.f32.gmra.mxu0 %v1215
        %v1217 = vpop.f32.mrf.mxu0
        %v1218 = vadd.f32 %v1168, %v1217
        %v1219 = vand.u32 %v392, 4294901760
        %v1220 = vsub.f32 %v392, %v1219
        %v1221 = vand.u32 %v1220, 4294901760
        %v1222 = vsub.f32 %v1220, %v1221
        %v1223 = vand.u32 %v1222, 4294901760
        %1224 = vmatmul.f32.gmra.mxu0 %v1223
        %v1225 = vpop.f32.mrf.mxu0
        %v1226 = vadd.f32 %v1168, %v1225
        %v1227 = vand.u32 %v395, 4294901760
        %v1228 = vsub.f32 %v395, %v1227
        %v1229 = vand.u32 %v1228, 4294901760
        %v1230 = vsub.f32 %v1228, %v1229
        %v1231 = vand.u32 %v1230, 4294901760
        %1232 = vmatmul.f32.gmra.mxu0 %v1231
        %v1233 = vpop.f32.mrf.mxu0
        %v1234 = vadd.f32 %v1168, %v1233
        %v1235 = vand.u32 %v398, 4294901760
        %v1236 = vsub.f32 %v398, %v1235
        %v1237 = vand.u32 %v1236, 4294901760
        %v1238 = vsub.f32 %v1236, %v1237
        %v1239 = vand.u32 %v1238, 4294901760
        %1240 = vmatmul.f32.gmra.mxu0 %v1239
        %v1241 = vpop.f32.mrf.mxu0
        %v1242 = vadd.f32 %v1168, %v1241
        %v1243 = vand.u32 %v401, 4294901760
        %v1244 = vsub.f32 %v401, %v1243
        %v1245 = vand.u32 %v1244, 4294901760
        %v1246 = vsub.f32 %v1244, %v1245
        %v1247 = vand.u32 %v1246, 4294901760
        %1248 = vmatmul.f32.gmra.mxu0 %v1247
        %v1249 = vpop.f32.mrf.mxu0
        %v1250 = vadd.f32 %v1168, %v1249
        %1251 = vdwg.mxu0
        %1252 = vmatpush.msra.mxu0 0.0
        %1253 = vmatpush.msra.mxu0 0.0
        %1254 = vmatpush.msra.mxu0 0.0
        %1255 = vmatpush.msra.mxu0 0.0
        %1256 = vmatpush.msra.mxu0 0.0
        %1257 = vmatpush.msra.mxu0 0.0
        %1258 = vmatpush.msra.mxu0 0.0
        %1259 = vmatpush.msra.mxu0 0.0
        %1260 = vmatpush.msra.mxu0 0.0
        %1261 = vmatpush.msra.mxu0 0.0
        %1262 = vmatpush.msra.mxu0 0.0
        %1263 = vmatpush.msra.mxu0 0.0
        %1264 = vmatpush.msra.mxu0 0.0
        %1265 = vmatpush.msra.mxu0 0.0
        %1266 = vmatpush.msra.mxu0 0.0
        %v1267 = vand.u32 %v1165, 4294901760
        %v1268 = vsub.f32 %v1165, %v1267
        %v1269 = vand.u32 %v1268, 4294901760
        %v1270 = vsub.f32 %v1268, %v1269
        %v1271 = vand.u32 %v1270, 4294901760
        %1272 = vmatpush.msra.mxu0 %v1271
        %v1273 = vand.u32 %v380, 4294901760
        %1274 = vmatmul.f32.gmra.mxu0 %v1273
        %v1275 = vpop.f32.mrf.mxu0
        %v1276 = vadd.f32 %v1194, %v1275
        %v1277 = vand.u32 %v383, 4294901760
        %1278 = vmatmul.f32.gmra.mxu0 %v1277
        %v1279 = vpop.f32.mrf.mxu0
        %v1280 = vadd.f32 %v1202, %v1279
        %v1281 = vand.u32 %v386, 4294901760
        %1282 = vmatmul.f32.gmra.mxu0 %v1281
        %v1283 = vpop.f32.mrf.mxu0
        %v1284 = vadd.f32 %v1210, %v1283
        %v1285 = vand.u32 %v389, 4294901760
        %1286 = vmatmul.f32.gmra.mxu0 %v1285
        %v1287 = vpop.f32.mrf.mxu0
        %v1288 = vadd.f32 %v1218, %v1287
        %v1289 = vand.u32 %v392, 4294901760
        %1290 = vmatmul.f32.gmra.mxu0 %v1289
        %v1291 = vpop.f32.mrf.mxu0
        %v1292 = vadd.f32 %v1226, %v1291
        %v1293 = vand.u32 %v395, 4294901760
        %1294 = vmatmul.f32.gmra.mxu0 %v1293
        %v1295 = vpop.f32.mrf.mxu0
        %v1296 = vadd.f32 %v1234, %v1295
        %v1297 = vand.u32 %v398, 4294901760
        %1298 = vmatmul.f32.gmra.mxu0 %v1297
        %v1299 = vpop.f32.mrf.mxu0
        %v1300 = vadd.f32 %v1242, %v1299
        %v1301 = vand.u32 %v401, 4294901760
        %1302 = vmatmul.f32.gmra.mxu0 %v1301
        %v1303 = vpop.f32.mrf.mxu0
        %v1304 = vadd.f32 %v1250, %v1303
        %1305 = vdwg.mxu0
        %1306 = vmatpush.msra.mxu0 0.0
        %1307 = vmatpush.msra.mxu0 0.0
        %1308 = vmatpush.msra.mxu0 0.0
        %1309 = vmatpush.msra.mxu0 0.0
        %1310 = vmatpush.msra.mxu0 0.0
        %1311 = vmatpush.msra.mxu0 0.0
        %1312 = vmatpush.msra.mxu0 0.0
        %1313 = vmatpush.msra.mxu0 0.0
        %1314 = vmatpush.msra.mxu0 0.0
        %1315 = vmatpush.msra.mxu0 0.0
        %1316 = vmatpush.msra.mxu0 0.0
        %1317 = vmatpush.msra.mxu0 0.0
        %1318 = vmatpush.msra.mxu0 0.0
        %1319 = vmatpush.msra.mxu0 0.0
        %1320 = vmatpush.msra.mxu0 0.0
        %v1321 = vand.u32 %v1165, 4294901760
        %v1322 = vsub.f32 %v1165, %v1321
        %1323 = vmatpush.msra.mxu0 %v1322
        %v1324 = vand.u32 %v380, 4294901760
        %v1325 = vsub.f32 %v380, %v1324
        %1326 = vmatmul.f32.gmra.mxu0 %v1325
        %v1327 = vpop.f32.mrf.mxu0
        %v1328 = vadd.f32 %v1276, %v1327
        %v1329 = vand.u32 %v383, 4294901760
        %v1330 = vsub.f32 %v383, %v1329
        %1331 = vmatmul.f32.gmra.mxu0 %v1330
        %v1332 = vpop.f32.mrf.mxu0
        %v1333 = vadd.f32 %v1280, %v1332
        %v1334 = vand.u32 %v386, 4294901760
        %v1335 = vsub.f32 %v386, %v1334
        %1336 = vmatmul.f32.gmra.mxu0 %v1335
        %v1337 = vpop.f32.mrf.mxu0
        %v1338 = vadd.f32 %v1284, %v1337
        %v1339 = vand.u32 %v389, 4294901760
        %v1340 = vsub.f32 %v389, %v1339
        %1341 = vmatmul.f32.gmra.mxu0 %v1340
        %v1342 = vpop.f32.mrf.mxu0
        %v1343 = vadd.f32 %v1288, %v1342
        %v1344 = vand.u32 %v392, 4294901760
        %v1345 = vsub.f32 %v392, %v1344
        %1346 = vmatmul.f32.gmra.mxu0 %v1345
        %v1347 = vpop.f32.mrf.mxu0
        %v1348 = vadd.f32 %v1292, %v1347
        %v1349 = vand.u32 %v395, 4294901760
        %v1350 = vsub.f32 %v395, %v1349
        %1351 = vmatmul.f32.gmra.mxu0 %v1350
        %v1352 = vpop.f32.mrf.mxu0
        %v1353 = vadd.f32 %v1296, %v1352
        %v1354 = vand.u32 %v398, 4294901760
        %v1355 = vsub.f32 %v398, %v1354
        %1356 = vmatmul.f32.gmra.mxu0 %v1355
        %v1357 = vpop.f32.mrf.mxu0
        %v1358 = vadd.f32 %v1300, %v1357
        %v1359 = vand.u32 %v401, 4294901760
        %v1360 = vsub.f32 %v401, %v1359
        %1361 = vmatmul.f32.gmra.mxu0 %v1360
        %v1362 = vpop.f32.mrf.mxu0
        %v1363 = vadd.f32 %v1304, %v1362
        %1364 = vdwg.mxu0
        %1365 = vmatpush.msra.mxu0 0.0
        %1366 = vmatpush.msra.mxu0 0.0
        %1367 = vmatpush.msra.mxu0 0.0
        %1368 = vmatpush.msra.mxu0 0.0
        %1369 = vmatpush.msra.mxu0 0.0
        %1370 = vmatpush.msra.mxu0 0.0
        %1371 = vmatpush.msra.mxu0 0.0
        %1372 = vmatpush.msra.mxu0 0.0
        %1373 = vmatpush.msra.mxu0 0.0
        %1374 = vmatpush.msra.mxu0 0.0
        %1375 = vmatpush.msra.mxu0 0.0
        %1376 = vmatpush.msra.mxu0 0.0
        %1377 = vmatpush.msra.mxu0 0.0
        %1378 = vmatpush.msra.mxu0 0.0
        %1379 = vmatpush.msra.mxu0 0.0
        %v1380 = vand.u32 %v1165, 4294901760
        %1381 = vmatpush.msra.mxu0 %v1380
        %v1382 = vand.u32 %v380, 4294901760
        %v1383 = vsub.f32 %v380, %v1382
        %v1384 = vand.u32 %v1383, 4294901760
        %1385 = vmatmul.f32.gmra.mxu0 %v1384
        %v1386 = vpop.f32.mrf.mxu0
        %v1387 = vadd.f32 %v1328, %v1386
        %v1388 = vand.u32 %v383, 4294901760
        %v1389 = vsub.f32 %v383, %v1388
        %v1390 = vand.u32 %v1389, 4294901760
        %1391 = vmatmul.f32.gmra.mxu0 %v1390
        %v1392 = vpop.f32.mrf.mxu0
        %v1393 = vadd.f32 %v1333, %v1392
        %v1394 = vand.u32 %v386, 4294901760
        %v1395 = vsub.f32 %v386, %v1394
        %v1396 = vand.u32 %v1395, 4294901760
        %1397 = vmatmul.f32.gmra.mxu0 %v1396
        %v1398 = vpop.f32.mrf.mxu0
        %v1399 = vadd.f32 %v1338, %v1398
        %v1400 = vand.u32 %v389, 4294901760
        %v1401 = vsub.f32 %v389, %v1400
        %v1402 = vand.u32 %v1401, 4294901760
        %1403 = vmatmul.f32.gmra.mxu0 %v1402
        %v1404 = vpop.f32.mrf.mxu0
        %v1405 = vadd.f32 %v1343, %v1404
        %v1406 = vand.u32 %v392, 4294901760
        %v1407 = vsub.f32 %v392, %v1406
        %v1408 = vand.u32 %v1407, 4294901760
        %1409 = vmatmul.f32.gmra.mxu0 %v1408
        %v1410 = vpop.f32.mrf.mxu0
        %v1411 = vadd.f32 %v1348, %v1410
        %v1412 = vand.u32 %v395, 4294901760
        %v1413 = vsub.f32 %v395, %v1412
        %v1414 = vand.u32 %v1413, 4294901760
        %1415 = vmatmul.f32.gmra.mxu0 %v1414
        %v1416 = vpop.f32.mrf.mxu0
        %v1417 = vadd.f32 %v1353, %v1416
        %v1418 = vand.u32 %v398, 4294901760
        %v1419 = vsub.f32 %v398, %v1418
        %v1420 = vand.u32 %v1419, 4294901760
        %1421 = vmatmul.f32.gmra.mxu0 %v1420
        %v1422 = vpop.f32.mrf.mxu0
        %v1423 = vadd.f32 %v1358, %v1422
        %v1424 = vand.u32 %v401, 4294901760
        %v1425 = vsub.f32 %v401, %v1424
        %v1426 = vand.u32 %v1425, 4294901760
        %1427 = vmatmul.f32.gmra.mxu0 %v1426
        %v1428 = vpop.f32.mrf.mxu0
        %v1429 = vadd.f32 %v1363, %v1428
        %1430 = vdwg.mxu0
        %1431 = vmatpush.msra.mxu0 0.0
        %1432 = vmatpush.msra.mxu0 0.0
        %1433 = vmatpush.msra.mxu0 0.0
        %1434 = vmatpush.msra.mxu0 0.0
        %1435 = vmatpush.msra.mxu0 0.0
        %1436 = vmatpush.msra.mxu0 0.0
        %1437 = vmatpush.msra.mxu0 0.0
        %1438 = vmatpush.msra.mxu0 0.0
        %1439 = vmatpush.msra.mxu0 0.0
        %1440 = vmatpush.msra.mxu0 0.0
        %1441 = vmatpush.msra.mxu0 0.0
        %1442 = vmatpush.msra.mxu0 0.0
        %1443 = vmatpush.msra.mxu0 0.0
        %1444 = vmatpush.msra.mxu0 0.0
        %1445 = vmatpush.msra.mxu0 0.0
        %v1446 = vand.u32 %v1165, 4294901760
        %v1447 = vsub.f32 %v1165, %v1446
        %v1448 = vand.u32 %v1447, 4294901760
        %1449 = vmatpush.msra.mxu0 %v1448
        %v1450 = vand.u32 %v380, 4294901760
        %1451 = vmatmul.f32.gmra.mxu0 %v1450
        %v1452 = vpop.f32.mrf.mxu0
        %v1453 = vadd.f32 %v1387, %v1452
        %v1454 = vand.u32 %v383, 4294901760
        %1455 = vmatmul.f32.gmra.mxu0 %v1454
        %v1456 = vpop.f32.mrf.mxu0
        %v1457 = vadd.f32 %v1393, %v1456
        %v1458 = vand.u32 %v386, 4294901760
        %1459 = vmatmul.f32.gmra.mxu0 %v1458
        %v1460 = vpop.f32.mrf.mxu0
        %v1461 = vadd.f32 %v1399, %v1460
        %v1462 = vand.u32 %v389, 4294901760
        %1463 = vmatmul.f32.gmra.mxu0 %v1462
        %v1464 = vpop.f32.mrf.mxu0
        %v1465 = vadd.f32 %v1405, %v1464
        %v1466 = vand.u32 %v392, 4294901760
        %1467 = vmatmul.f32.gmra.mxu0 %v1466
        %v1468 = vpop.f32.mrf.mxu0
        %v1469 = vadd.f32 %v1411, %v1468
        %v1470 = vand.u32 %v395, 4294901760
        %1471 = vmatmul.f32.gmra.mxu0 %v1470
        %v1472 = vpop.f32.mrf.mxu0
        %v1473 = vadd.f32 %v1417, %v1472
        %v1474 = vand.u32 %v398, 4294901760
        %1475 = vmatmul.f32.gmra.mxu0 %v1474
        %v1476 = vpop.f32.mrf.mxu0
        %v1477 = vadd.f32 %v1423, %v1476
        %v1478 = vand.u32 %v401, 4294901760
        %1479 = vmatmul.f32.gmra.mxu0 %v1478
        %v1480 = vpop.f32.mrf.mxu0
        %v1481 = vadd.f32 %v1429, %v1480
        %1482 = vdwg.mxu0
        %1483 = vmatpush.msra.mxu0 0.0
        %1484 = vmatpush.msra.mxu0 0.0
        %1485 = vmatpush.msra.mxu0 0.0
        %1486 = vmatpush.msra.mxu0 0.0
        %1487 = vmatpush.msra.mxu0 0.0
        %1488 = vmatpush.msra.mxu0 0.0
        %1489 = vmatpush.msra.mxu0 0.0
        %1490 = vmatpush.msra.mxu0 0.0
        %1491 = vmatpush.msra.mxu0 0.0
        %1492 = vmatpush.msra.mxu0 0.0
        %1493 = vmatpush.msra.mxu0 0.0
        %1494 = vmatpush.msra.mxu0 0.0
        %1495 = vmatpush.msra.mxu0 0.0
        %1496 = vmatpush.msra.mxu0 0.0
        %1497 = vmatpush.msra.mxu0 0.0
        %v1498 = vand.u32 %v1165, 4294901760
        %1499 = vmatpush.msra.mxu0 %v1498
        %v1500 = vand.u32 %v380, 4294901760
        %1501 = vmatmul.f32.gmra.mxu0 %v1500
        %v1502 = vpop.f32.mrf.mxu0
        %v1503 = vadd.f32 %v1453, %v1502
        %v1504 = vand.u32 %v383, 4294901760
        %1505 = vmatmul.f32.gmra.mxu0 %v1504
        %v1506 = vpop.f32.mrf.mxu0
        %v1507 = vadd.f32 %v1457, %v1506
        %v1508 = vand.u32 %v386, 4294901760
        %1509 = vmatmul.f32.gmra.mxu0 %v1508
        %v1510 = vpop.f32.mrf.mxu0
        %v1511 = vadd.f32 %v1461, %v1510
        %v1512 = vand.u32 %v389, 4294901760
        %1513 = vmatmul.f32.gmra.mxu0 %v1512
        %v1514 = vpop.f32.mrf.mxu0
        %v1515 = vadd.f32 %v1465, %v1514
        %v1516 = vand.u32 %v392, 4294901760
        %1517 = vmatmul.f32.gmra.mxu0 %v1516
        %v1518 = vpop.f32.mrf.mxu0
        %v1519 = vadd.f32 %v1469, %v1518
        %v1520 = vand.u32 %v395, 4294901760
        %1521 = vmatmul.f32.gmra.mxu0 %v1520
        %v1522 = vpop.f32.mrf.mxu0
        %v1523 = vadd.f32 %v1473, %v1522
        %v1524 = vand.u32 %v398, 4294901760
        %1525 = vmatmul.f32.gmra.mxu0 %v1524
        %v1526 = vpop.f32.mrf.mxu0
        %v1527 = vadd.f32 %v1477, %v1526
        %v1528 = vand.u32 %v401, 4294901760
        %1529 = vmatmul.f32.gmra.mxu0 %v1528
        %v1530 = vpop.f32.mrf.mxu0
        %v1531 = vadd.f32 %v1481, %v1530
        %1532 = vdwg.mxu0
        %v1533 = vmul.f32 %v1157, -0.5
        %v1534 = vmul.f32 %v1158, -0.5
        %v1535 = vmul.f32 %v1159, -0.5
        %v1536 = vmul.f32 %v1160, -0.5
        %v1537 = vmul.f32 %v1161, -0.5
        %v1538 = vmul.f32 %v1162, -0.5
        %v1539 = vmul.f32 %v1163, -0.5
        %v1540 = vmul.f32 %v1164, -0.5
        %v1541 = vmul.f32 %v1533, 1.442695
        %v1542 = vpow.pop %v1541
        %v1543 = vmul.f32 %v1534, 1.442695
        %v1544 = vpow.pop %v1543
        %v1545 = vmul.f32 %v1535, 1.442695
        %v1546 = vpow.pop %v1545
        %v1547 = vmul.f32 %v1536, 1.442695
        %v1548 = vpow.pop %v1547
        %v1549 = vmul.f32 %v1537, 1.442695
        %v1550 = vpow.pop %v1549
        %v1551 = vmul.f32 %v1538, 1.442695
        %v1552 = vpow.pop %v1551
        %v1553 = vmul.f32 %v1539, 1.442695
        %v1554 = vpow.pop %v1553
        %v1555 = vmul.f32 %v1540, 1.442695
        %v1556 = vpow.pop %v1555
        %v1557 = vand.u32 2147483647, %v1503
        %vm1558 = vcmp.le.f32.partialorder %v1557, 0.7853982
        %vm1559 = vcmp.lt.s32.totalorder %v1503, 0
        %v1560 = vand.u32 %v1503, 2139095040
        %v1561 = vshrl.u32 %v1560, 23
        %v1562 = vsub.s32 %v1561, 127
        %v1563 = vand.u32 2147483647, %v1503
        %v1564 = vand.u32 %v1563, 8388607
        %v1565 = vor.u32 %v1564, 8388608
        %v1566 = vsub.s32 0, %v1565
        %v1567 = vadd.s32 %v1562, 1
        %vm1568 = vcmp.gt.s32.totalorder %v1567, 0
        %v1569 = vsel %vm1568, %v1567, 0
        %v1570 = vshrl.u32 %v1569, 5
        %v1571 = vand.u32 %v1569, 31
        %v1572 = vsub.s32 32, %v1571
        %v1573 = vshrl.u32 683565275, %v1572
        %v1574 = vshll.u32 683565275, %v1571
        %v1575 = vshrl.u32 2475754826, %v1572
        %v1576 = vor.u32 %v1574, %v1575
        %v1577 = vshll.u32 2475754826, %v1571
        %v1578 = vshrl.u32 2131351028, %v1572
        %v1579 = vor.u32 %v1577, %v1578
        %v1580 = vshll.u32 2131351028, %v1571
        %v1581 = vshrl.u32 2102212464, %v1572
        %v1582 = vor.u32 %v1580, %v1581
        %v1583 = vshll.u32 2102212464, %v1571
        %v1584 = vshrl.u32 920167782, %v1572
        %v1585 = vor.u32 %v1583, %v1584
        %v1586 = vshll.u32 920167782, %v1571
        %v1587 = vshrl.u32 1326507024, %v1572
        %v1588 = vor.u32 %v1586, %v1587
        %vm1589 = vcmp.lt.s32.totalorder %v1570, 1
        %vm1590 = vcmp.lt.s32.totalorder %v1570, 2
        %vm1591 = vcmp.lt.s32.totalorder %v1570, 3
        %vm1592 = vcmp.lt.s32.totalorder %v1570, 4
        %v1593 = vsel %vm1589, %v1573, %v1576
        %v1594 = vsel %vm1592, %v1582, 2102212464
        %v1595 = vsel %vm1591, %v1579, %v1594
        %v1596 = vsel %vm1590, %v1593, %v1595
        %v1597 = vsel %vm1589, %v1576, %v1579
        %v1598 = vsel %vm1592, %v1585, 920167782
        %v1599 = vsel %vm1591, %v1582, %v1598
        %v1600 = vsel %vm1590, %v1597, %v1599
        %v1601 = vsel %vm1589, %v1579, %v1582
        %v1602 = vsel %vm1592, %v1588, 1326507024
        %v1603 = vsel %vm1591, %v1585, %v1602
        %v1604 = vsel %vm1590, %v1601, %v1603
        %v1605 = vshll.u32 %v1565, 8
        %v1606 = vand.u32 %v1605, 65535
        %v1607 = vshrl.u32 %v1605, 16
        %v1608 = vand.u32 %v1604, 65535
        %v1609 = vshrl.u32 %v1604, 16
        %v1610 = vmul.u32 %v1606, %v1608
        %v1611 = vmul.u32 %v1606, %v1609
        %v1612 = vmul.u32 %v1607, %v1608
        %v1613 = vmul.u32 %v1607, %v1609
        %v1614 = vshll.u32 %v1611, 16
        %v1615 = vshrl.u32 %v1611, 16
        %v1616 = vshll.u32 %v1612, 16
        %v1617 = vshrl.u32 %v1612, 16
        %vm1618 = vc.u32 %v1610, %v1614
        %v1619 = vsel %vm1618, 1, 0
        %v1620 = vadd.s32 %v1610, %v1614
        %v1621 = vadd.s32 %v1613, %v1619
        %vm1622 = vc.u32 %v1620, %v1616
        %v1623 = vsel %vm1622, 1, 0
        %v1624 = vadd.s32 %v1620, %v1616
        %v1625 = vadd.s32 %v1621, %v1623
        %v1626 = vadd.s32 %v1625, %v1615
        %v1627 = vadd.s32 %v1626, %v1617
        %v1628 = vand.u32 %v1605, 65535
        %v1629 = vshrl.u32 %v1605, 16
        %v1630 = vand.u32 %v1600, 65535
        %v1631 = vshrl.u32 %v1600, 16
        %v1632 = vmul.u32 %v1628, %v1630
        %v1633 = vmul.u32 %v1628, %v1631
        %v1634 = vmul.u32 %v1629, %v1630
        %v1635 = vmul.u32 %v1629, %v1631
        %v1636 = vshll.u32 %v1633, 16
        %v1637 = vshrl.u32 %v1633, 16
        %v1638 = vshll.u32 %v1634, 16
        %v1639 = vshrl.u32 %v1634, 16
        %vm1640 = vc.u32 %v1632, %v1636
        %v1641 = vsel %vm1640, 1, 0
        %v1642 = vadd.s32 %v1632, %v1636
        %v1643 = vadd.s32 %v1635, %v1641
        %vm1644 = vc.u32 %v1642, %v1638
        %v1645 = vsel %vm1644, 1, 0
        %v1646 = vadd.s32 %v1642, %v1638
        %v1647 = vadd.s32 %v1643, %v1645
        %v1648 = vadd.s32 %v1647, %v1637
        %v1649 = vadd.s32 %v1648, %v1639
        %v1650 = vmul.u32 %v1605, %v1596
        %v1651 = vadd.s32 %v1627, %v1646
        %vm1652 = vc.u32 %v1627, %v1646
        %v1653 = vadd.s32 %v1649, 1
        %v1654 = vsel %vm1652, %v1653, %v1649
        %v1655 = vadd.s32 %v1650, %v1654
        %v1656 = vadd.s32 %v1655, 536870912
        %v1657 = vshrl.u32 %v1656, 30
        %v1658 = vshll.u32 %v1657, 30
        %v1659 = vsub.s32 %v1655, %v1658
        %vm1660 = vcmp.lt.s32.totalorder %v1659, 0
        %v1661 = vsub.s32 0, %v1659
        %v1662 = vsel %vm1660, %v1661, %v1659
        %v1663 = vclz %v1662
        %v1664 = vsub.s32 %v1663, 2
        %vm1665 = vcmp.gt.s32.totalorder 0, %v1664
        %v1666 = vsel %vm1665, 0, %v1664
        %v1667 = vsub.s32 32, %v1666
        %v1668 = vshll.u32 %v1659, %v1666
        %v1669 = vshrl.u32 %v1651, %v1667
        %v1670 = vor.u32 %v1668, %v1669
        %v1671 = vsub.s32 4294967266, %v1666
        %v1672 = vadd.s32 %v1671, 127
        %v1673 = vshll.u32 %v1672, 23
        %v1674 = vor.u32 4788187, %v1673
        %v1675 = vand.u32 2147483647, %v1674
        %v1677 = vcvt.s32.f32 %v1670
        %v1678 = vmul.f32 %v1677, %v1675
        %v1679 = vxor.u32 %v1678, 2147483648
        %v1680 = vsel %vm1559, %v1679, %v1678
        %v1681 = vsub.s32 4, %v1657
        %v1682 = vsel %vm1559, %v1681, %v1657
        %v1683 = vsel %vm1558, %v1503, %v1680
        %v1684 = vsel %vm1558, 0, %v1682
        %v1685 = vmul.f32 %v1683, %v1683
        %v1686 = vmul.f32 %v1685, -0.001358992
        %v1687 = vadd.f32 %v1686, 0.041655596
        %v1688 = vmul.f32 %v1685, %v1687
        %v1689 = vadd.f32 %v1688, -0.4999988
        %v1690 = vmul.f32 %v1685, %v1689
        %v1691 = vadd.f32 1.0, %v1690
        %v1692 = vmul.f32 %v1683, %v1683
        %v1693 = vmul.f32 %v1692, -0.00019511016
        %v1694 = vadd.f32 %v1693, 0.008332121
        %v1695 = vmul.f32 %v1692, %v1694
        %v1696 = vadd.f32 %v1695, -0.16666654
        %v1697 = vmul.f32 %v1692, %v1696
        %v1698 = vadd.f32 %v1697, 1.0
        %v1699 = vmul.f32 %v1698, %v1683
        %vm1700 = vweird.f32 %v1503
        %v1701 = vadd.s32 %v1684, 3
        %v1702 = vand.u32 %v1701, 3
        %vm1703 = vcmp.lt.s32.totalorder %v1702, 2
        %vm1704 = vcmp.eq.s32.totalorder %v1702, 0
        %v1705 = vxor.u32 %v1699, 2147483648
        %v1706 = vsel %vm1704, %v1691, %v1705
        %vm1707 = vcmp.eq.s32.totalorder %v1702, 2
        %v1708 = vxor.u32 %v1691, 2147483648
        %v1709 = vsel %vm1707, %v1708, %v1699
        %v1710 = vsel %vm1703, %v1706, %v1709
        %v1711 = vsel %vm1700, nan, %v1710
        %v1712 = vand.u32 2147483647, %v1507
        %vm1713 = vcmp.le.f32.partialorder %v1712, 0.7853982
        %vm1714 = vcmp.lt.s32.totalorder %v1507, 0
        %v1715 = vand.u32 %v1507, 2139095040
        %v1716 = vshrl.u32 %v1715, 23
        %v1717 = vsub.s32 %v1716, 127
        %v1718 = vand.u32 2147483647, %v1507
        %v1719 = vand.u32 %v1718, 8388607
        %v1720 = vor.u32 %v1719, 8388608
        %v1721 = vsub.s32 0, %v1720
        %v1722 = vadd.s32 %v1717, 1
        %vm1723 = vcmp.gt.s32.totalorder %v1722, 0
        %v1724 = vsel %vm1723, %v1722, 0
        %v1725 = vshrl.u32 %v1724, 5
        %v1726 = vand.u32 %v1724, 31
        %v1727 = vsub.s32 32, %v1726
        %v1728 = vshrl.u32 683565275, %v1727
        %v1729 = vshll.u32 683565275, %v1726
        %v1730 = vshrl.u32 2475754826, %v1727
        %v1731 = vor.u32 %v1729, %v1730
        %v1732 = vshll.u32 2475754826, %v1726
        %v1733 = vshrl.u32 2131351028, %v1727
        %v1734 = vor.u32 %v1732, %v1733
        %v1735 = vshll.u32 2131351028, %v1726
        %v1736 = vshrl.u32 2102212464, %v1727
        %v1737 = vor.u32 %v1735, %v1736
        %v1738 = vshll.u32 2102212464, %v1726
        %v1739 = vshrl.u32 920167782, %v1727
        %v1740 = vor.u32 %v1738, %v1739
        %v1741 = vshll.u32 920167782, %v1726
        %v1742 = vshrl.u32 1326507024, %v1727
        %v1743 = vor.u32 %v1741, %v1742
        %vm1744 = vcmp.lt.s32.totalorder %v1725, 1
        %vm1745 = vcmp.lt.s32.totalorder %v1725, 2
        %vm1746 = vcmp.lt.s32.totalorder %v1725, 3
        %vm1747 = vcmp.lt.s32.totalorder %v1725, 4
        %v1748 = vsel %vm1744, %v1728, %v1731
        %v1749 = vsel %vm1747, %v1737, 2102212464
        %v1750 = vsel %vm1746, %v1734, %v1749
        %v1751 = vsel %vm1745, %v1748, %v1750
        %v1752 = vsel %vm1744, %v1731, %v1734
        %v1753 = vsel %vm1747, %v1740, 920167782
        %v1754 = vsel %vm1746, %v1737, %v1753
        %v1755 = vsel %vm1745, %v1752, %v1754
        %v1756 = vsel %vm1744, %v1734, %v1737
        %v1757 = vsel %vm1747, %v1743, 1326507024
        %v1758 = vsel %vm1746, %v1740, %v1757
        %v1759 = vsel %vm1745, %v1756, %v1758
        %v1760 = vshll.u32 %v1720, 8
        %v1761 = vand.u32 %v1760, 65535
        %v1762 = vshrl.u32 %v1760, 16
        %v1763 = vand.u32 %v1759, 65535
        %v1764 = vshrl.u32 %v1759, 16
        %v1765 = vmul.u32 %v1761, %v1763
        %v1766 = vmul.u32 %v1761, %v1764
        %v1767 = vmul.u32 %v1762, %v1763
        %v1768 = vmul.u32 %v1762, %v1764
        %v1769 = vshll.u32 %v1766, 16
        %v1770 = vshrl.u32 %v1766, 16
        %v1771 = vshll.u32 %v1767, 16
        %v1772 = vshrl.u32 %v1767, 16
        %vm1773 = vc.u32 %v1765, %v1769
        %v1774 = vsel %vm1773, 1, 0
        %v1775 = vadd.s32 %v1765, %v1769
        %v1776 = vadd.s32 %v1768, %v1774
        %vm1777 = vc.u32 %v1775, %v1771
        %v1778 = vsel %vm1777, 1, 0
        %v1779 = vadd.s32 %v1775, %v1771
        %v1780 = vadd.s32 %v1776, %v1778
        %v1781 = vadd.s32 %v1780, %v1770
        %v1782 = vadd.s32 %v1781, %v1772
        %v1783 = vand.u32 %v1760, 65535
        %v1784 = vshrl.u32 %v1760, 16
        %v1785 = vand.u32 %v1755, 65535
        %v1786 = vshrl.u32 %v1755, 16
        %v1787 = vmul.u32 %v1783, %v1785
        %v1788 = vmul.u32 %v1783, %v1786
        %v1789 = vmul.u32 %v1784, %v1785
        %v1790 = vmul.u32 %v1784, %v1786
        %v1791 = vshll.u32 %v1788, 16
        %v1792 = vshrl.u32 %v1788, 16
        %v1793 = vshll.u32 %v1789, 16
        %v1794 = vshrl.u32 %v1789, 16
        %vm1795 = vc.u32 %v1787, %v1791
        %v1796 = vsel %vm1795, 1, 0
        %v1797 = vadd.s32 %v1787, %v1791
        %v1798 = vadd.s32 %v1790, %v1796
        %vm1799 = vc.u32 %v1797, %v1793
        %v1800 = vsel %vm1799, 1, 0
        %v1801 = vadd.s32 %v1797, %v1793
        %v1802 = vadd.s32 %v1798, %v1800
        %v1803 = vadd.s32 %v1802, %v1792
        %v1804 = vadd.s32 %v1803, %v1794
        %v1805 = vmul.u32 %v1760, %v1751
        %v1806 = vadd.s32 %v1782, %v1801
        %vm1807 = vc.u32 %v1782, %v1801
        %v1808 = vadd.s32 %v1804, 1
        %v1809 = vsel %vm1807, %v1808, %v1804
        %v1810 = vadd.s32 %v1805, %v1809
        %v1811 = vadd.s32 %v1810, 536870912
        %v1812 = vshrl.u32 %v1811, 30
        %v1813 = vshll.u32 %v1812, 30
        %v1814 = vsub.s32 %v1810, %v1813
        %vm1815 = vcmp.lt.s32.totalorder %v1814, 0
        %v1816 = vsub.s32 0, %v1814
        %v1817 = vsel %vm1815, %v1816, %v1814
        %v1818 = vclz %v1817
        %v1819 = vsub.s32 %v1818, 2
        %vm1820 = vcmp.gt.s32.totalorder 0, %v1819
        %v1821 = vsel %vm1820, 0, %v1819
        %v1822 = vsub.s32 32, %v1821
        %v1823 = vshll.u32 %v1814, %v1821
        %v1824 = vshrl.u32 %v1806, %v1822
        %v1825 = vor.u32 %v1823, %v1824
        %v1826 = vsub.s32 4294967266, %v1821
        %v1827 = vadd.s32 %v1826, 127
        %v1828 = vshll.u32 %v1827, 23
        %v1829 = vor.u32 4788187, %v1828
        %v1830 = vand.u32 2147483647, %v1829
        %v1832 = vcvt.s32.f32 %v1825
        %v1833 = vmul.f32 %v1832, %v1830
        %v1834 = vxor.u32 %v1833, 2147483648
        %v1835 = vsel %vm1714, %v1834, %v1833
        %v1836 = vsub.s32 4, %v1812
        %v1837 = vsel %vm1714, %v1836, %v1812
        %v1838 = vsel %vm1713, %v1507, %v1835
        %v1839 = vsel %vm1713, 0, %v1837
        %v1840 = vmul.f32 %v1838, %v1838
        %v1841 = vmul.f32 %v1840, -0.001358992
        %v1842 = vadd.f32 %v1841, 0.041655596
        %v1843 = vmul.f32 %v1840, %v1842
        %v1844 = vadd.f32 %v1843, -0.4999988
        %v1845 = vmul.f32 %v1840, %v1844
        %v1846 = vadd.f32 1.0, %v1845
        %v1847 = vmul.f32 %v1838, %v1838
        %v1848 = vmul.f32 %v1847, -0.00019511016
        %v1849 = vadd.f32 %v1848, 0.008332121
        %v1850 = vmul.f32 %v1847, %v1849
        %v1851 = vadd.f32 %v1850, -0.16666654
        %v1852 = vmul.f32 %v1847, %v1851
        %v1853 = vadd.f32 %v1852, 1.0
        %v1854 = vmul.f32 %v1853, %v1838
        %vm1855 = vweird.f32 %v1507
        %v1856 = vadd.s32 %v1839, 3
        %v1857 = vand.u32 %v1856, 3
        %vm1858 = vcmp.lt.s32.totalorder %v1857, 2
        %vm1859 = vcmp.eq.s32.totalorder %v1857, 0
        %v1860 = vxor.u32 %v1854, 2147483648
        %v1861 = vsel %vm1859, %v1846, %v1860
        %vm1862 = vcmp.eq.s32.totalorder %v1857, 2
        %v1863 = vxor.u32 %v1846, 2147483648
        %v1864 = vsel %vm1862, %v1863, %v1854
        %v1865 = vsel %vm1858, %v1861, %v1864
        %v1866 = vsel %vm1855, nan, %v1865
        %v1867 = vand.u32 2147483647, %v1511
        %vm1868 = vcmp.le.f32.partialorder %v1867, 0.7853982
        %vm1869 = vcmp.lt.s32.totalorder %v1511, 0
        %v1870 = vand.u32 %v1511, 2139095040
        %v1871 = vshrl.u32 %v1870, 23
        %v1872 = vsub.s32 %v1871, 127
        %v1873 = vand.u32 2147483647, %v1511
        %v1874 = vand.u32 %v1873, 8388607
        %v1875 = vor.u32 %v1874, 8388608
        %v1876 = vsub.s32 0, %v1875
        %v1877 = vadd.s32 %v1872, 1
        %vm1878 = vcmp.gt.s32.totalorder %v1877, 0
        %v1879 = vsel %vm1878, %v1877, 0
        %v1880 = vshrl.u32 %v1879, 5
        %v1881 = vand.u32 %v1879, 31
        %v1882 = vsub.s32 32, %v1881
        %v1883 = vshrl.u32 683565275, %v1882
        %v1884 = vshll.u32 683565275, %v1881
        %v1885 = vshrl.u32 2475754826, %v1882
        %v1886 = vor.u32 %v1884, %v1885
        %v1887 = vshll.u32 2475754826, %v1881
        %v1888 = vshrl.u32 2131351028, %v1882
        %v1889 = vor.u32 %v1887, %v1888
        %v1890 = vshll.u32 2131351028, %v1881
        %v1891 = vshrl.u32 2102212464, %v1882
        %v1892 = vor.u32 %v1890, %v1891
        %v1893 = vshll.u32 2102212464, %v1881
        %v1894 = vshrl.u32 920167782, %v1882
        %v1895 = vor.u32 %v1893, %v1894
        %v1896 = vshll.u32 920167782, %v1881
        %v1897 = vshrl.u32 1326507024, %v1882
        %v1898 = vor.u32 %v1896, %v1897
        %vm1899 = vcmp.lt.s32.totalorder %v1880, 1
        %vm1900 = vcmp.lt.s32.totalorder %v1880, 2
        %vm1901 = vcmp.lt.s32.totalorder %v1880, 3
        %vm1902 = vcmp.lt.s32.totalorder %v1880, 4
        %v1903 = vsel %vm1899, %v1883, %v1886
        %v1904 = vsel %vm1902, %v1892, 2102212464
        %v1905 = vsel %vm1901, %v1889, %v1904
        %v1906 = vsel %vm1900, %v1903, %v1905
        %v1907 = vsel %vm1899, %v1886, %v1889
        %v1908 = vsel %vm1902, %v1895, 920167782
        %v1909 = vsel %vm1901, %v1892, %v1908
        %v1910 = vsel %vm1900, %v1907, %v1909
        %v1911 = vsel %vm1899, %v1889, %v1892
        %v1912 = vsel %vm1902, %v1898, 1326507024
        %v1913 = vsel %vm1901, %v1895, %v1912
        %v1914 = vsel %vm1900, %v1911, %v1913
        %v1915 = vshll.u32 %v1875, 8
        %v1916 = vand.u32 %v1915, 65535
        %v1917 = vshrl.u32 %v1915, 16
        %v1918 = vand.u32 %v1914, 65535
        %v1919 = vshrl.u32 %v1914, 16
        %v1920 = vmul.u32 %v1916, %v1918
        %v1921 = vmul.u32 %v1916, %v1919
        %v1922 = vmul.u32 %v1917, %v1918
        %v1923 = vmul.u32 %v1917, %v1919
        %v1924 = vshll.u32 %v1921, 16
        %v1925 = vshrl.u32 %v1921, 16
        %v1926 = vshll.u32 %v1922, 16
        %v1927 = vshrl.u32 %v1922, 16
        %vm1928 = vc.u32 %v1920, %v1924
        %v1929 = vsel %vm1928, 1, 0
        %v1930 = vadd.s32 %v1920, %v1924
        %v1931 = vadd.s32 %v1923, %v1929
        %vm1932 = vc.u32 %v1930, %v1926
        %v1933 = vsel %vm1932, 1, 0
        %v1934 = vadd.s32 %v1930, %v1926
        %v1935 = vadd.s32 %v1931, %v1933
        %v1936 = vadd.s32 %v1935, %v1925
        %v1937 = vadd.s32 %v1936, %v1927
        %v1938 = vand.u32 %v1915, 65535
        %v1939 = vshrl.u32 %v1915, 16
        %v1940 = vand.u32 %v1910, 65535
        %v1941 = vshrl.u32 %v1910, 16
        %v1942 = vmul.u32 %v1938, %v1940
        %v1943 = vmul.u32 %v1938, %v1941
        %v1944 = vmul.u32 %v1939, %v1940
        %v1945 = vmul.u32 %v1939, %v1941
        %v1946 = vshll.u32 %v1943, 16
        %v1947 = vshrl.u32 %v1943, 16
        %v1948 = vshll.u32 %v1944, 16
        %v1949 = vshrl.u32 %v1944, 16
        %vm1950 = vc.u32 %v1942, %v1946
        %v1951 = vsel %vm1950, 1, 0
        %v1952 = vadd.s32 %v1942, %v1946
        %v1953 = vadd.s32 %v1945, %v1951
        %vm1954 = vc.u32 %v1952, %v1948
        %v1955 = vsel %vm1954, 1, 0
        %v1956 = vadd.s32 %v1952, %v1948
        %v1957 = vadd.s32 %v1953, %v1955
        %v1958 = vadd.s32 %v1957, %v1947
        %v1959 = vadd.s32 %v1958, %v1949
        %v1960 = vmul.u32 %v1915, %v1906
        %v1961 = vadd.s32 %v1937, %v1956
        %vm1962 = vc.u32 %v1937, %v1956
        %v1963 = vadd.s32 %v1959, 1
        %v1964 = vsel %vm1962, %v1963, %v1959
        %v1965 = vadd.s32 %v1960, %v1964
        %v1966 = vadd.s32 %v1965, 536870912
        %v1967 = vshrl.u32 %v1966, 30
        %v1968 = vshll.u32 %v1967, 30
        %v1969 = vsub.s32 %v1965, %v1968
        %vm1970 = vcmp.lt.s32.totalorder %v1969, 0
        %v1971 = vsub.s32 0, %v1969
        %v1972 = vsel %vm1970, %v1971, %v1969
        %v1973 = vclz %v1972
        %v1974 = vsub.s32 %v1973, 2
        %vm1975 = vcmp.gt.s32.totalorder 0, %v1974
        %v1976 = vsel %vm1975, 0, %v1974
        %v1977 = vsub.s32 32, %v1976
        %v1978 = vshll.u32 %v1969, %v1976
        %v1979 = vshrl.u32 %v1961, %v1977
        %v1980 = vor.u32 %v1978, %v1979
        %v1981 = vsub.s32 4294967266, %v1976
        %v1982 = vadd.s32 %v1981, 127
        %v1983 = vshll.u32 %v1982, 23
        %v1984 = vor.u32 4788187, %v1983
        %v1985 = vand.u32 2147483647, %v1984
        %v1987 = vcvt.s32.f32 %v1980
        %v1988 = vmul.f32 %v1987, %v1985
        %v1989 = vxor.u32 %v1988, 2147483648
        %v1990 = vsel %vm1869, %v1989, %v1988
        %v1991 = vsub.s32 4, %v1967
        %v1992 = vsel %vm1869, %v1991, %v1967
        %v1993 = vsel %vm1868, %v1511, %v1990
        %v1994 = vsel %vm1868, 0, %v1992
        %v1995 = vmul.f32 %v1993, %v1993
        %v1996 = vmul.f32 %v1995, -0.001358992
        %v1997 = vadd.f32 %v1996, 0.041655596
        %v1998 = vmul.f32 %v1995, %v1997
        %v1999 = vadd.f32 %v1998, -0.4999988
        %v2000 = vmul.f32 %v1995, %v1999
        %v2001 = vadd.f32 1.0, %v2000
        %v2002 = vmul.f32 %v1993, %v1993
        %v2003 = vmul.f32 %v2002, -0.00019511016
        %v2004 = vadd.f32 %v2003, 0.008332121
        %v2005 = vmul.f32 %v2002, %v2004
        %v2006 = vadd.f32 %v2005, -0.16666654
        %v2007 = vmul.f32 %v2002, %v2006
        %v2008 = vadd.f32 %v2007, 1.0
        %v2009 = vmul.f32 %v2008, %v1993
        %vm2010 = vweird.f32 %v1511
        %v2011 = vadd.s32 %v1994, 3
        %v2012 = vand.u32 %v2011, 3
        %vm2013 = vcmp.lt.s32.totalorder %v2012, 2
        %vm2014 = vcmp.eq.s32.totalorder %v2012, 0
        %v2015 = vxor.u32 %v2009, 2147483648
        %v2016 = vsel %vm2014, %v2001, %v2015
        %vm2017 = vcmp.eq.s32.totalorder %v2012, 2
        %v2018 = vxor.u32 %v2001, 2147483648
        %v2019 = vsel %vm2017, %v2018, %v2009
        %v2020 = vsel %vm2013, %v2016, %v2019
        %v2021 = vsel %vm2010, nan, %v2020
        %v2022 = vand.u32 2147483647, %v1515
        %vm2023 = vcmp.le.f32.partialorder %v2022, 0.7853982
        %vm2024 = vcmp.lt.s32.totalorder %v1515, 0
        %v2025 = vand.u32 %v1515, 2139095040
        %v2026 = vshrl.u32 %v2025, 23
        %v2027 = vsub.s32 %v2026, 127
        %v2028 = vand.u32 2147483647, %v1515
        %v2029 = vand.u32 %v2028, 8388607
        %v2030 = vor.u32 %v2029, 8388608
        %v2031 = vsub.s32 0, %v2030
        %v2032 = vadd.s32 %v2027, 1
        %vm2033 = vcmp.gt.s32.totalorder %v2032, 0
        %v2034 = vsel %vm2033, %v2032, 0
        %v2035 = vshrl.u32 %v2034, 5
        %v2036 = vand.u32 %v2034, 31
        %v2037 = vsub.s32 32, %v2036
        %v2038 = vshrl.u32 683565275, %v2037
        %v2039 = vshll.u32 683565275, %v2036
        %v2040 = vshrl.u32 2475754826, %v2037
        %v2041 = vor.u32 %v2039, %v2040
        %v2042 = vshll.u32 2475754826, %v2036
        %v2043 = vshrl.u32 2131351028, %v2037
        %v2044 = vor.u32 %v2042, %v2043
        %v2045 = vshll.u32 2131351028, %v2036
        %v2046 = vshrl.u32 2102212464, %v2037
        %v2047 = vor.u32 %v2045, %v2046
        %v2048 = vshll.u32 2102212464, %v2036
        %v2049 = vshrl.u32 920167782, %v2037
        %v2050 = vor.u32 %v2048, %v2049
        %v2051 = vshll.u32 920167782, %v2036
        %v2052 = vshrl.u32 1326507024, %v2037
        %v2053 = vor.u32 %v2051, %v2052
        %vm2054 = vcmp.lt.s32.totalorder %v2035, 1
        %vm2055 = vcmp.lt.s32.totalorder %v2035, 2
        %vm2056 = vcmp.lt.s32.totalorder %v2035, 3
        %vm2057 = vcmp.lt.s32.totalorder %v2035, 4
        %v2058 = vsel %vm2054, %v2038, %v2041
        %v2059 = vsel %vm2057, %v2047, 2102212464
        %v2060 = vsel %vm2056, %v2044, %v2059
        %v2061 = vsel %vm2055, %v2058, %v2060
        %v2062 = vsel %vm2054, %v2041, %v2044
        %v2063 = vsel %vm2057, %v2050, 920167782
        %v2064 = vsel %vm2056, %v2047, %v2063
        %v2065 = vsel %vm2055, %v2062, %v2064
        %v2066 = vsel %vm2054, %v2044, %v2047
        %v2067 = vsel %vm2057, %v2053, 1326507024
        %v2068 = vsel %vm2056, %v2050, %v2067
        %v2069 = vsel %vm2055, %v2066, %v2068
        %v2070 = vshll.u32 %v2030, 8
        %v2071 = vand.u32 %v2070, 65535
        %v2072 = vshrl.u32 %v2070, 16
        %v2073 = vand.u32 %v2069, 65535
        %v2074 = vshrl.u32 %v2069, 16
        %v2075 = vmul.u32 %v2071, %v2073
        %v2076 = vmul.u32 %v2071, %v2074
        %v2077 = vmul.u32 %v2072, %v2073
        %v2078 = vmul.u32 %v2072, %v2074
        %v2079 = vshll.u32 %v2076, 16
        %v2080 = vshrl.u32 %v2076, 16
        %v2081 = vshll.u32 %v2077, 16
        %v2082 = vshrl.u32 %v2077, 16
        %vm2083 = vc.u32 %v2075, %v2079
        %v2084 = vsel %vm2083, 1, 0
        %v2085 = vadd.s32 %v2075, %v2079
        %v2086 = vadd.s32 %v2078, %v2084
        %vm2087 = vc.u32 %v2085, %v2081
        %v2088 = vsel %vm2087, 1, 0
        %v2089 = vadd.s32 %v2085, %v2081
        %v2090 = vadd.s32 %v2086, %v2088
        %v2091 = vadd.s32 %v2090, %v2080
        %v2092 = vadd.s32 %v2091, %v2082
        %v2093 = vand.u32 %v2070, 65535
        %v2094 = vshrl.u32 %v2070, 16
        %v2095 = vand.u32 %v2065, 65535
        %v2096 = vshrl.u32 %v2065, 16
        %v2097 = vmul.u32 %v2093, %v2095
        %v2098 = vmul.u32 %v2093, %v2096
        %v2099 = vmul.u32 %v2094, %v2095
        %v2100 = vmul.u32 %v2094, %v2096
        %v2101 = vshll.u32 %v2098, 16
        %v2102 = vshrl.u32 %v2098, 16
        %v2103 = vshll.u32 %v2099, 16
        %v2104 = vshrl.u32 %v2099, 16
        %vm2105 = vc.u32 %v2097, %v2101
        %v2106 = vsel %vm2105, 1, 0
        %v2107 = vadd.s32 %v2097, %v2101
        %v2108 = vadd.s32 %v2100, %v2106
        %vm2109 = vc.u32 %v2107, %v2103
        %v2110 = vsel %vm2109, 1, 0
        %v2111 = vadd.s32 %v2107, %v2103
        %v2112 = vadd.s32 %v2108, %v2110
        %v2113 = vadd.s32 %v2112, %v2102
        %v2114 = vadd.s32 %v2113, %v2104
        %v2115 = vmul.u32 %v2070, %v2061
        %v2116 = vadd.s32 %v2092, %v2111
        %vm2117 = vc.u32 %v2092, %v2111
        %v2118 = vadd.s32 %v2114, 1
        %v2119 = vsel %vm2117, %v2118, %v2114
        %v2120 = vadd.s32 %v2115, %v2119
        %v2121 = vadd.s32 %v2120, 536870912
        %v2122 = vshrl.u32 %v2121, 30
        %v2123 = vshll.u32 %v2122, 30
        %v2124 = vsub.s32 %v2120, %v2123
        %vm2125 = vcmp.lt.s32.totalorder %v2124, 0
        %v2126 = vsub.s32 0, %v2124
        %v2127 = vsel %vm2125, %v2126, %v2124
        %v2128 = vclz %v2127
        %v2129 = vsub.s32 %v2128, 2
        %vm2130 = vcmp.gt.s32.totalorder 0, %v2129
        %v2131 = vsel %vm2130, 0, %v2129
        %v2132 = vsub.s32 32, %v2131
        %v2133 = vshll.u32 %v2124, %v2131
        %v2134 = vshrl.u32 %v2116, %v2132
        %v2135 = vor.u32 %v2133, %v2134
        %v2136 = vsub.s32 4294967266, %v2131
        %v2137 = vadd.s32 %v2136, 127
        %v2138 = vshll.u32 %v2137, 23
        %v2139 = vor.u32 4788187, %v2138
        %v2140 = vand.u32 2147483647, %v2139
        %v2142 = vcvt.s32.f32 %v2135
        %v2143 = vmul.f32 %v2142, %v2140
        %v2144 = vxor.u32 %v2143, 2147483648
        %v2145 = vsel %vm2024, %v2144, %v2143
        %v2146 = vsub.s32 4, %v2122
        %v2147 = vsel %vm2024, %v2146, %v2122
        %v2148 = vsel %vm2023, %v1515, %v2145
        %v2149 = vsel %vm2023, 0, %v2147
        %v2150 = vmul.f32 %v2148, %v2148
        %v2151 = vmul.f32 %v2150, -0.001358992
        %v2152 = vadd.f32 %v2151, 0.041655596
        %v2153 = vmul.f32 %v2150, %v2152
        %v2154 = vadd.f32 %v2153, -0.4999988
        %v2155 = vmul.f32 %v2150, %v2154
        %v2156 = vadd.f32 1.0, %v2155
        %v2157 = vmul.f32 %v2148, %v2148
        %v2158 = vmul.f32 %v2157, -0.00019511016
        %v2159 = vadd.f32 %v2158, 0.008332121
        %v2160 = vmul.f32 %v2157, %v2159
        %v2161 = vadd.f32 %v2160, -0.16666654
        %v2162 = vmul.f32 %v2157, %v2161
        %v2163 = vadd.f32 %v2162, 1.0
        %v2164 = vmul.f32 %v2163, %v2148
        %vm2165 = vweird.f32 %v1515
        %v2166 = vadd.s32 %v2149, 3
        %v2167 = vand.u32 %v2166, 3
        %vm2168 = vcmp.lt.s32.totalorder %v2167, 2
        %vm2169 = vcmp.eq.s32.totalorder %v2167, 0
        %v2170 = vxor.u32 %v2164, 2147483648
        %v2171 = vsel %vm2169, %v2156, %v2170
        %vm2172 = vcmp.eq.s32.totalorder %v2167, 2
        %v2173 = vxor.u32 %v2156, 2147483648
        %v2174 = vsel %vm2172, %v2173, %v2164
        %v2175 = vsel %vm2168, %v2171, %v2174
        %v2176 = vsel %vm2165, nan, %v2175
        %v2177 = vand.u32 2147483647, %v1519
        %vm2178 = vcmp.le.f32.partialorder %v2177, 0.7853982
        %vm2179 = vcmp.lt.s32.totalorder %v1519, 0
        %v2180 = vand.u32 %v1519, 2139095040
        %v2181 = vshrl.u32 %v2180, 23
        %v2182 = vsub.s32 %v2181, 127
        %v2183 = vand.u32 2147483647, %v1519
        %v2184 = vand.u32 %v2183, 8388607
        %v2185 = vor.u32 %v2184, 8388608
        %v2186 = vsub.s32 0, %v2185
        %v2187 = vadd.s32 %v2182, 1
        %vm2188 = vcmp.gt.s32.totalorder %v2187, 0
        %v2189 = vsel %vm2188, %v2187, 0
        %v2190 = vshrl.u32 %v2189, 5
        %v2191 = vand.u32 %v2189, 31
        %v2192 = vsub.s32 32, %v2191
        %v2193 = vshrl.u32 683565275, %v2192
        %v2194 = vshll.u32 683565275, %v2191
        %v2195 = vshrl.u32 2475754826, %v2192
        %v2196 = vor.u32 %v2194, %v2195
        %v2197 = vshll.u32 2475754826, %v2191
        %v2198 = vshrl.u32 2131351028, %v2192
        %v2199 = vor.u32 %v2197, %v2198
        %v2200 = vshll.u32 2131351028, %v2191
        %v2201 = vshrl.u32 2102212464, %v2192
        %v2202 = vor.u32 %v2200, %v2201
        %v2203 = vshll.u32 2102212464, %v2191
        %v2204 = vshrl.u32 920167782, %v2192
        %v2205 = vor.u32 %v2203, %v2204
        %v2206 = vshll.u32 920167782, %v2191
        %v2207 = vshrl.u32 1326507024, %v2192
        %v2208 = vor.u32 %v2206, %v2207
        %vm2209 = vcmp.lt.s32.totalorder %v2190, 1
        %vm2210 = vcmp.lt.s32.totalorder %v2190, 2
        %vm2211 = vcmp.lt.s32.totalorder %v2190, 3
        %vm2212 = vcmp.lt.s32.totalorder %v2190, 4
        %v2213 = vsel %vm2209, %v2193, %v2196
        %v2214 = vsel %vm2212, %v2202, 2102212464
        %v2215 = vsel %vm2211, %v2199, %v2214
        %v2216 = vsel %vm2210, %v2213, %v2215
        %v2217 = vsel %vm2209, %v2196, %v2199
        %v2218 = vsel %vm2212, %v2205, 920167782
        %v2219 = vsel %vm2211, %v2202, %v2218
        %v2220 = vsel %vm2210, %v2217, %v2219
        %v2221 = vsel %vm2209, %v2199, %v2202
        %v2222 = vsel %vm2212, %v2208, 1326507024
        %v2223 = vsel %vm2211, %v2205, %v2222
        %v2224 = vsel %vm2210, %v2221, %v2223
        %v2225 = vshll.u32 %v2185, 8
        %v2226 = vand.u32 %v2225, 65535
        %v2227 = vshrl.u32 %v2225, 16
        %v2228 = vand.u32 %v2224, 65535
        %v2229 = vshrl.u32 %v2224, 16
        %v2230 = vmul.u32 %v2226, %v2228
        %v2231 = vmul.u32 %v2226, %v2229
        %v2232 = vmul.u32 %v2227, %v2228
        %v2233 = vmul.u32 %v2227, %v2229
        %v2234 = vshll.u32 %v2231, 16
        %v2235 = vshrl.u32 %v2231, 16
        %v2236 = vshll.u32 %v2232, 16
        %v2237 = vshrl.u32 %v2232, 16
        %vm2238 = vc.u32 %v2230, %v2234
        %v2239 = vsel %vm2238, 1, 0
        %v2240 = vadd.s32 %v2230, %v2234
        %v2241 = vadd.s32 %v2233, %v2239
        %vm2242 = vc.u32 %v2240, %v2236
        %v2243 = vsel %vm2242, 1, 0
        %v2244 = vadd.s32 %v2240, %v2236
        %v2245 = vadd.s32 %v2241, %v2243
        %v2246 = vadd.s32 %v2245, %v2235
        %v2247 = vadd.s32 %v2246, %v2237
        %v2248 = vand.u32 %v2225, 65535
        %v2249 = vshrl.u32 %v2225, 16
        %v2250 = vand.u32 %v2220, 65535
        %v2251 = vshrl.u32 %v2220, 16
        %v2252 = vmul.u32 %v2248, %v2250
        %v2253 = vmul.u32 %v2248, %v2251
        %v2254 = vmul.u32 %v2249, %v2250
        %v2255 = vmul.u32 %v2249, %v2251
        %v2256 = vshll.u32 %v2253, 16
        %v2257 = vshrl.u32 %v2253, 16
        %v2258 = vshll.u32 %v2254, 16
        %v2259 = vshrl.u32 %v2254, 16
        %vm2260 = vc.u32 %v2252, %v2256
        %v2261 = vsel %vm2260, 1, 0
        %v2262 = vadd.s32 %v2252, %v2256
        %v2263 = vadd.s32 %v2255, %v2261
        %vm2264 = vc.u32 %v2262, %v2258
        %v2265 = vsel %vm2264, 1, 0
        %v2266 = vadd.s32 %v2262, %v2258
        %v2267 = vadd.s32 %v2263, %v2265
        %v2268 = vadd.s32 %v2267, %v2257
        %v2269 = vadd.s32 %v2268, %v2259
        %v2270 = vmul.u32 %v2225, %v2216
        %v2271 = vadd.s32 %v2247, %v2266
        %vm2272 = vc.u32 %v2247, %v2266
        %v2273 = vadd.s32 %v2269, 1
        %v2274 = vsel %vm2272, %v2273, %v2269
        %v2275 = vadd.s32 %v2270, %v2274
        %v2276 = vadd.s32 %v2275, 536870912
        %v2277 = vshrl.u32 %v2276, 30
        %v2278 = vshll.u32 %v2277, 30
        %v2279 = vsub.s32 %v2275, %v2278
        %vm2280 = vcmp.lt.s32.totalorder %v2279, 0
        %v2281 = vsub.s32 0, %v2279
        %v2282 = vsel %vm2280, %v2281, %v2279
        %v2283 = vclz %v2282
        %v2284 = vsub.s32 %v2283, 2
        %vm2285 = vcmp.gt.s32.totalorder 0, %v2284
        %v2286 = vsel %vm2285, 0, %v2284
        %v2287 = vsub.s32 32, %v2286
        %v2288 = vshll.u32 %v2279, %v2286
        %v2289 = vshrl.u32 %v2271, %v2287
        %v2290 = vor.u32 %v2288, %v2289
        %v2291 = vsub.s32 4294967266, %v2286
        %v2292 = vadd.s32 %v2291, 127
        %v2293 = vshll.u32 %v2292, 23
        %v2294 = vor.u32 4788187, %v2293
        %v2295 = vand.u32 2147483647, %v2294
        %v2297 = vcvt.s32.f32 %v2290
        %v2298 = vmul.f32 %v2297, %v2295
        %v2299 = vxor.u32 %v2298, 2147483648
        %v2300 = vsel %vm2179, %v2299, %v2298
        %v2301 = vsub.s32 4, %v2277
        %v2302 = vsel %vm2179, %v2301, %v2277
        %v2303 = vsel %vm2178, %v1519, %v2300
        %v2304 = vsel %vm2178, 0, %v2302
        %v2305 = vmul.f32 %v2303, %v2303
        %v2306 = vmul.f32 %v2305, -0.001358992
        %v2307 = vadd.f32 %v2306, 0.041655596
        %v2308 = vmul.f32 %v2305, %v2307
        %v2309 = vadd.f32 %v2308, -0.4999988
        %v2310 = vmul.f32 %v2305, %v2309
        %v2311 = vadd.f32 1.0, %v2310
        %v2312 = vmul.f32 %v2303, %v2303
        %v2313 = vmul.f32 %v2312, -0.00019511016
        %v2314 = vadd.f32 %v2313, 0.008332121
        %v2315 = vmul.f32 %v2312, %v2314
        %v2316 = vadd.f32 %v2315, -0.16666654
        %v2317 = vmul.f32 %v2312, %v2316
        %v2318 = vadd.f32 %v2317, 1.0
        %v2319 = vmul.f32 %v2318, %v2303
        %vm2320 = vweird.f32 %v1519
        %v2321 = vadd.s32 %v2304, 3
        %v2322 = vand.u32 %v2321, 3
        %vm2323 = vcmp.lt.s32.totalorder %v2322, 2
        %vm2324 = vcmp.eq.s32.totalorder %v2322, 0
        %v2325 = vxor.u32 %v2319, 2147483648
        %v2326 = vsel %vm2324, %v2311, %v2325
        %vm2327 = vcmp.eq.s32.totalorder %v2322, 2
        %v2328 = vxor.u32 %v2311, 2147483648
        %v2329 = vsel %vm2327, %v2328, %v2319
        %v2330 = vsel %vm2323, %v2326, %v2329
        %v2331 = vsel %vm2320, nan, %v2330
        %v2332 = vand.u32 2147483647, %v1523
        %vm2333 = vcmp.le.f32.partialorder %v2332, 0.7853982
        %vm2334 = vcmp.lt.s32.totalorder %v1523, 0
        %v2335 = vand.u32 %v1523, 2139095040
        %v2336 = vshrl.u32 %v2335, 23
        %v2337 = vsub.s32 %v2336, 127
        %v2338 = vand.u32 2147483647, %v1523
        %v2339 = vand.u32 %v2338, 8388607
        %v2340 = vor.u32 %v2339, 8388608
        %v2341 = vsub.s32 0, %v2340
        %v2342 = vadd.s32 %v2337, 1
        %vm2343 = vcmp.gt.s32.totalorder %v2342, 0
        %v2344 = vsel %vm2343, %v2342, 0
        %v2345 = vshrl.u32 %v2344, 5
        %v2346 = vand.u32 %v2344, 31
        %v2347 = vsub.s32 32, %v2346
        %v2348 = vshrl.u32 683565275, %v2347
        %v2349 = vshll.u32 683565275, %v2346
        %v2350 = vshrl.u32 2475754826, %v2347
        %v2351 = vor.u32 %v2349, %v2350
        %v2352 = vshll.u32 2475754826, %v2346
        %v2353 = vshrl.u32 2131351028, %v2347
        %v2354 = vor.u32 %v2352, %v2353
        %v2355 = vshll.u32 2131351028, %v2346
        %v2356 = vshrl.u32 2102212464, %v2347
        %v2357 = vor.u32 %v2355, %v2356
        %v2358 = vshll.u32 2102212464, %v2346
        %v2359 = vshrl.u32 920167782, %v2347
        %v2360 = vor.u32 %v2358, %v2359
        %v2361 = vshll.u32 920167782, %v2346
        %v2362 = vshrl.u32 1326507024, %v2347
        %v2363 = vor.u32 %v2361, %v2362
        %vm2364 = vcmp.lt.s32.totalorder %v2345, 1
        %vm2365 = vcmp.lt.s32.totalorder %v2345, 2
        %vm2366 = vcmp.lt.s32.totalorder %v2345, 3
        %vm2367 = vcmp.lt.s32.totalorder %v2345, 4
        %v2368 = vsel %vm2364, %v2348, %v2351
        %v2369 = vsel %vm2367, %v2357, 2102212464
        %v2370 = vsel %vm2366, %v2354, %v2369
        %v2371 = vsel %vm2365, %v2368, %v2370
        %v2372 = vsel %vm2364, %v2351, %v2354
        %v2373 = vsel %vm2367, %v2360, 920167782
        %v2374 = vsel %vm2366, %v2357, %v2373
        %v2375 = vsel %vm2365, %v2372, %v2374
        %v2376 = vsel %vm2364, %v2354, %v2357
        %v2377 = vsel %vm2367, %v2363, 1326507024
        %v2378 = vsel %vm2366, %v2360, %v2377
        %v2379 = vsel %vm2365, %v2376, %v2378
        %v2380 = vshll.u32 %v2340, 8
        %v2381 = vand.u32 %v2380, 65535
        %v2382 = vshrl.u32 %v2380, 16
        %v2383 = vand.u32 %v2379, 65535
        %v2384 = vshrl.u32 %v2379, 16
        %v2385 = vmul.u32 %v2381, %v2383
        %v2386 = vmul.u32 %v2381, %v2384
        %v2387 = vmul.u32 %v2382, %v2383
        %v2388 = vmul.u32 %v2382, %v2384
        %v2389 = vshll.u32 %v2386, 16
        %v2390 = vshrl.u32 %v2386, 16
        %v2391 = vshll.u32 %v2387, 16
        %v2392 = vshrl.u32 %v2387, 16
        %vm2393 = vc.u32 %v2385, %v2389
        %v2394 = vsel %vm2393, 1, 0
        %v2395 = vadd.s32 %v2385, %v2389
        %v2396 = vadd.s32 %v2388, %v2394
        %vm2397 = vc.u32 %v2395, %v2391
        %v2398 = vsel %vm2397, 1, 0
        %v2399 = vadd.s32 %v2395, %v2391
        %v2400 = vadd.s32 %v2396, %v2398
        %v2401 = vadd.s32 %v2400, %v2390
        %v2402 = vadd.s32 %v2401, %v2392
        %v2403 = vand.u32 %v2380, 65535
        %v2404 = vshrl.u32 %v2380, 16
        %v2405 = vand.u32 %v2375, 65535
        %v2406 = vshrl.u32 %v2375, 16
        %v2407 = vmul.u32 %v2403, %v2405
        %v2408 = vmul.u32 %v2403, %v2406
        %v2409 = vmul.u32 %v2404, %v2405
        %v2410 = vmul.u32 %v2404, %v2406
        %v2411 = vshll.u32 %v2408, 16
        %v2412 = vshrl.u32 %v2408, 16
        %v2413 = vshll.u32 %v2409, 16
        %v2414 = vshrl.u32 %v2409, 16
        %vm2415 = vc.u32 %v2407, %v2411
        %v2416 = vsel %vm2415, 1, 0
        %v2417 = vadd.s32 %v2407, %v2411
        %v2418 = vadd.s32 %v2410, %v2416
        %vm2419 = vc.u32 %v2417, %v2413
        %v2420 = vsel %vm2419, 1, 0
        %v2421 = vadd.s32 %v2417, %v2413
        %v2422 = vadd.s32 %v2418, %v2420
        %v2423 = vadd.s32 %v2422, %v2412
        %v2424 = vadd.s32 %v2423, %v2414
        %v2425 = vmul.u32 %v2380, %v2371
        %v2426 = vadd.s32 %v2402, %v2421
        %vm2427 = vc.u32 %v2402, %v2421
        %v2428 = vadd.s32 %v2424, 1
        %v2429 = vsel %vm2427, %v2428, %v2424
        %v2430 = vadd.s32 %v2425, %v2429
        %v2431 = vadd.s32 %v2430, 536870912
        %v2432 = vshrl.u32 %v2431, 30
        %v2433 = vshll.u32 %v2432, 30
        %v2434 = vsub.s32 %v2430, %v2433
        %vm2435 = vcmp.lt.s32.totalorder %v2434, 0
        %v2436 = vsub.s32 0, %v2434
        %v2437 = vsel %vm2435, %v2436, %v2434
        %v2438 = vclz %v2437
        %v2439 = vsub.s32 %v2438, 2
        %vm2440 = vcmp.gt.s32.totalorder 0, %v2439
        %v2441 = vsel %vm2440, 0, %v2439
        %v2442 = vsub.s32 32, %v2441
        %v2443 = vshll.u32 %v2434, %v2441
        %v2444 = vshrl.u32 %v2426, %v2442
        %v2445 = vor.u32 %v2443, %v2444
        %v2446 = vsub.s32 4294967266, %v2441
        %v2447 = vadd.s32 %v2446, 127
        %v2448 = vshll.u32 %v2447, 23
        %v2449 = vor.u32 4788187, %v2448
        %v2450 = vand.u32 2147483647, %v2449
        %v2452 = vcvt.s32.f32 %v2445
        %v2453 = vmul.f32 %v2452, %v2450
        %v2454 = vxor.u32 %v2453, 2147483648
        %v2455 = vsel %vm2334, %v2454, %v2453
        %v2456 = vsub.s32 4, %v2432
        %v2457 = vsel %vm2334, %v2456, %v2432
        %v2458 = vsel %vm2333, %v1523, %v2455
        %v2459 = vsel %vm2333, 0, %v2457
        %v2460 = vmul.f32 %v2458, %v2458
        %v2461 = vmul.f32 %v2460, -0.001358992
        %v2462 = vadd.f32 %v2461, 0.041655596
        %v2463 = vmul.f32 %v2460, %v2462
        %v2464 = vadd.f32 %v2463, -0.4999988
        %v2465 = vmul.f32 %v2460, %v2464
        %v2466 = vadd.f32 1.0, %v2465
        %v2467 = vmul.f32 %v2458, %v2458
        %v2468 = vmul.f32 %v2467, -0.00019511016
        %v2469 = vadd.f32 %v2468, 0.008332121
        %v2470 = vmul.f32 %v2467, %v2469
        %v2471 = vadd.f32 %v2470, -0.16666654
        %v2472 = vmul.f32 %v2467, %v2471
        %v2473 = vadd.f32 %v2472, 1.0
        %v2474 = vmul.f32 %v2473, %v2458
        %vm2475 = vweird.f32 %v1523
        %v2476 = vadd.s32 %v2459, 3
        %v2477 = vand.u32 %v2476, 3
        %vm2478 = vcmp.lt.s32.totalorder %v2477, 2
        %vm2479 = vcmp.eq.s32.totalorder %v2477, 0
        %v2480 = vxor.u32 %v2474, 2147483648
        %v2481 = vsel %vm2479, %v2466, %v2480
        %vm2482 = vcmp.eq.s32.totalorder %v2477, 2
        %v2483 = vxor.u32 %v2466, 2147483648
        %v2484 = vsel %vm2482, %v2483, %v2474
        %v2485 = vsel %vm2478, %v2481, %v2484
        %v2486 = vsel %vm2475, nan, %v2485
        %v2487 = vand.u32 2147483647, %v1527
        %vm2488 = vcmp.le.f32.partialorder %v2487, 0.7853982
        %vm2489 = vcmp.lt.s32.totalorder %v1527, 0
        %v2490 = vand.u32 %v1527, 2139095040
        %v2491 = vshrl.u32 %v2490, 23
        %v2492 = vsub.s32 %v2491, 127
        %v2493 = vand.u32 2147483647, %v1527
        %v2494 = vand.u32 %v2493, 8388607
        %v2495 = vor.u32 %v2494, 8388608
        %v2496 = vsub.s32 0, %v2495
        %v2497 = vadd.s32 %v2492, 1
        %vm2498 = vcmp.gt.s32.totalorder %v2497, 0
        %v2499 = vsel %vm2498, %v2497, 0
        %v2500 = vshrl.u32 %v2499, 5
        %v2501 = vand.u32 %v2499, 31
        %v2502 = vsub.s32 32, %v2501
        %v2503 = vshrl.u32 683565275, %v2502
        %v2504 = vshll.u32 683565275, %v2501
        %v2505 = vshrl.u32 2475754826, %v2502
        %v2506 = vor.u32 %v2504, %v2505
        %v2507 = vshll.u32 2475754826, %v2501
        %v2508 = vshrl.u32 2131351028, %v2502
        %v2509 = vor.u32 %v2507, %v2508
        %v2510 = vshll.u32 2131351028, %v2501
        %v2511 = vshrl.u32 2102212464, %v2502
        %v2512 = vor.u32 %v2510, %v2511
        %v2513 = vshll.u32 2102212464, %v2501
        %v2514 = vshrl.u32 920167782, %v2502
        %v2515 = vor.u32 %v2513, %v2514
        %v2516 = vshll.u32 920167782, %v2501
        %v2517 = vshrl.u32 1326507024, %v2502
        %v2518 = vor.u32 %v2516, %v2517
        %vm2519 = vcmp.lt.s32.totalorder %v2500, 1
        %vm2520 = vcmp.lt.s32.totalorder %v2500, 2
        %vm2521 = vcmp.lt.s32.totalorder %v2500, 3
        %vm2522 = vcmp.lt.s32.totalorder %v2500, 4
        %v2523 = vsel %vm2519, %v2503, %v2506
        %v2524 = vsel %vm2522, %v2512, 2102212464
        %v2525 = vsel %vm2521, %v2509, %v2524
        %v2526 = vsel %vm2520, %v2523, %v2525
        %v2527 = vsel %vm2519, %v2506, %v2509
        %v2528 = vsel %vm2522, %v2515, 920167782
        %v2529 = vsel %vm2521, %v2512, %v2528
        %v2530 = vsel %vm2520, %v2527, %v2529
        %v2531 = vsel %vm2519, %v2509, %v2512
        %v2532 = vsel %vm2522, %v2518, 1326507024
        %v2533 = vsel %vm2521, %v2515, %v2532
        %v2534 = vsel %vm2520, %v2531, %v2533
        %v2535 = vshll.u32 %v2495, 8
        %v2536 = vand.u32 %v2535, 65535
        %v2537 = vshrl.u32 %v2535, 16
        %v2538 = vand.u32 %v2534, 65535
        %v2539 = vshrl.u32 %v2534, 16
        %v2540 = vmul.u32 %v2536, %v2538
        %v2541 = vmul.u32 %v2536, %v2539
        %v2542 = vmul.u32 %v2537, %v2538
        %v2543 = vmul.u32 %v2537, %v2539
        %v2544 = vshll.u32 %v2541, 16
        %v2545 = vshrl.u32 %v2541, 16
        %v2546 = vshll.u32 %v2542, 16
        %v2547 = vshrl.u32 %v2542, 16
        %vm2548 = vc.u32 %v2540, %v2544
        %v2549 = vsel %vm2548, 1, 0
        %v2550 = vadd.s32 %v2540, %v2544
        %v2551 = vadd.s32 %v2543, %v2549
        %vm2552 = vc.u32 %v2550, %v2546
        %v2553 = vsel %vm2552, 1, 0
        %v2554 = vadd.s32 %v2550, %v2546
        %v2555 = vadd.s32 %v2551, %v2553
        %v2556 = vadd.s32 %v2555, %v2545
        %v2557 = vadd.s32 %v2556, %v2547
        %v2558 = vand.u32 %v2535, 65535
        %v2559 = vshrl.u32 %v2535, 16
        %v2560 = vand.u32 %v2530, 65535
        %v2561 = vshrl.u32 %v2530, 16
        %v2562 = vmul.u32 %v2558, %v2560
        %v2563 = vmul.u32 %v2558, %v2561
        %v2564 = vmul.u32 %v2559, %v2560
        %v2565 = vmul.u32 %v2559, %v2561
        %v2566 = vshll.u32 %v2563, 16
        %v2567 = vshrl.u32 %v2563, 16
        %v2568 = vshll.u32 %v2564, 16
        %v2569 = vshrl.u32 %v2564, 16
        %vm2570 = vc.u32 %v2562, %v2566
        %v2571 = vsel %vm2570, 1, 0
        %v2572 = vadd.s32 %v2562, %v2566
        %v2573 = vadd.s32 %v2565, %v2571
        %vm2574 = vc.u32 %v2572, %v2568
        %v2575 = vsel %vm2574, 1, 0
        %v2576 = vadd.s32 %v2572, %v2568
        %v2577 = vadd.s32 %v2573, %v2575
        %v2578 = vadd.s32 %v2577, %v2567
        %v2579 = vadd.s32 %v2578, %v2569
        %v2580 = vmul.u32 %v2535, %v2526
        %v2581 = vadd.s32 %v2557, %v2576
        %vm2582 = vc.u32 %v2557, %v2576
        %v2583 = vadd.s32 %v2579, 1
        %v2584 = vsel %vm2582, %v2583, %v2579
        %v2585 = vadd.s32 %v2580, %v2584
        %v2586 = vadd.s32 %v2585, 536870912
        %v2587 = vshrl.u32 %v2586, 30
        %v2588 = vshll.u32 %v2587, 30
        %v2589 = vsub.s32 %v2585, %v2588
        %vm2590 = vcmp.lt.s32.totalorder %v2589, 0
        %v2591 = vsub.s32 0, %v2589
        %v2592 = vsel %vm2590, %v2591, %v2589
        %v2593 = vclz %v2592
        %v2594 = vsub.s32 %v2593, 2
        %vm2595 = vcmp.gt.s32.totalorder 0, %v2594
        %v2596 = vsel %vm2595, 0, %v2594
        %v2597 = vsub.s32 32, %v2596
        %v2598 = vshll.u32 %v2589, %v2596
        %v2599 = vshrl.u32 %v2581, %v2597
        %v2600 = vor.u32 %v2598, %v2599
        %v2601 = vsub.s32 4294967266, %v2596
        %v2602 = vadd.s32 %v2601, 127
        %v2603 = vshll.u32 %v2602, 23
        %v2604 = vor.u32 4788187, %v2603
        %v2605 = vand.u32 2147483647, %v2604
        %v2607 = vcvt.s32.f32 %v2600
        %v2608 = vmul.f32 %v2607, %v2605
        %v2609 = vxor.u32 %v2608, 2147483648
        %v2610 = vsel %vm2489, %v2609, %v2608
        %v2611 = vsub.s32 4, %v2587
        %v2612 = vsel %vm2489, %v2611, %v2587
        %v2613 = vsel %vm2488, %v1527, %v2610
        %v2614 = vsel %vm2488, 0, %v2612
        %v2615 = vmul.f32 %v2613, %v2613
        %v2616 = vmul.f32 %v2615, -0.001358992
        %v2617 = vadd.f32 %v2616, 0.041655596
        %v2618 = vmul.f32 %v2615, %v2617
        %v2619 = vadd.f32 %v2618, -0.4999988
        %v2620 = vmul.f32 %v2615, %v2619
        %v2621 = vadd.f32 1.0, %v2620
        %v2622 = vmul.f32 %v2613, %v2613
        %v2623 = vmul.f32 %v2622, -0.00019511016
        %v2624 = vadd.f32 %v2623, 0.008332121
        %v2625 = vmul.f32 %v2622, %v2624
        %v2626 = vadd.f32 %v2625, -0.16666654
        %v2627 = vmul.f32 %v2622, %v2626
        %v2628 = vadd.f32 %v2627, 1.0
        %v2629 = vmul.f32 %v2628, %v2613
        %vm2630 = vweird.f32 %v1527
        %v2631 = vadd.s32 %v2614, 3
        %v2632 = vand.u32 %v2631, 3
        %vm2633 = vcmp.lt.s32.totalorder %v2632, 2
        %vm2634 = vcmp.eq.s32.totalorder %v2632, 0
        %v2635 = vxor.u32 %v2629, 2147483648
        %v2636 = vsel %vm2634, %v2621, %v2635
        %vm2637 = vcmp.eq.s32.totalorder %v2632, 2
        %v2638 = vxor.u32 %v2621, 2147483648
        %v2639 = vsel %vm2637, %v2638, %v2629
        %v2640 = vsel %vm2633, %v2636, %v2639
        %v2641 = vsel %vm2630, nan, %v2640
        %v2642 = vand.u32 2147483647, %v1531
        %vm2643 = vcmp.le.f32.partialorder %v2642, 0.7853982
        %vm2644 = vcmp.lt.s32.totalorder %v1531, 0
        %v2645 = vand.u32 %v1531, 2139095040
        %v2646 = vshrl.u32 %v2645, 23
        %v2647 = vsub.s32 %v2646, 127
        %v2648 = vand.u32 2147483647, %v1531
        %v2649 = vand.u32 %v2648, 8388607
        %v2650 = vor.u32 %v2649, 8388608
        %v2651 = vsub.s32 0, %v2650
        %v2652 = vadd.s32 %v2647, 1
        %vm2653 = vcmp.gt.s32.totalorder %v2652, 0
        %v2654 = vsel %vm2653, %v2652, 0
        %v2655 = vshrl.u32 %v2654, 5
        %v2656 = vand.u32 %v2654, 31
        %v2657 = vsub.s32 32, %v2656
        %v2658 = vshrl.u32 683565275, %v2657
        %v2659 = vshll.u32 683565275, %v2656
        %v2660 = vshrl.u32 2475754826, %v2657
        %v2661 = vor.u32 %v2659, %v2660
        %v2662 = vshll.u32 2475754826, %v2656
        %v2663 = vshrl.u32 2131351028, %v2657
        %v2664 = vor.u32 %v2662, %v2663
        %v2665 = vshll.u32 2131351028, %v2656
        %v2666 = vshrl.u32 2102212464, %v2657
        %v2667 = vor.u32 %v2665, %v2666
        %v2668 = vshll.u32 2102212464, %v2656
        %v2669 = vshrl.u32 920167782, %v2657
        %v2670 = vor.u32 %v2668, %v2669
        %v2671 = vshll.u32 920167782, %v2656
        %v2672 = vshrl.u32 1326507024, %v2657
        %v2673 = vor.u32 %v2671, %v2672
        %vm2674 = vcmp.lt.s32.totalorder %v2655, 1
        %vm2675 = vcmp.lt.s32.totalorder %v2655, 2
        %vm2676 = vcmp.lt.s32.totalorder %v2655, 3
        %vm2677 = vcmp.lt.s32.totalorder %v2655, 4
        %v2678 = vsel %vm2674, %v2658, %v2661
        %v2679 = vsel %vm2677, %v2667, 2102212464
        %v2680 = vsel %vm2676, %v2664, %v2679
        %v2681 = vsel %vm2675, %v2678, %v2680
        %v2682 = vsel %vm2674, %v2661, %v2664
        %v2683 = vsel %vm2677, %v2670, 920167782
        %v2684 = vsel %vm2676, %v2667, %v2683
        %v2685 = vsel %vm2675, %v2682, %v2684
        %v2686 = vsel %vm2674, %v2664, %v2667
        %v2687 = vsel %vm2677, %v2673, 1326507024
        %v2688 = vsel %vm2676, %v2670, %v2687
        %v2689 = vsel %vm2675, %v2686, %v2688
        %v2690 = vshll.u32 %v2650, 8
        %v2691 = vand.u32 %v2690, 65535
        %v2692 = vshrl.u32 %v2690, 16
        %v2693 = vand.u32 %v2689, 65535
        %v2694 = vshrl.u32 %v2689, 16
        %v2695 = vmul.u32 %v2691, %v2693
        %v2696 = vmul.u32 %v2691, %v2694
        %v2697 = vmul.u32 %v2692, %v2693
        %v2698 = vmul.u32 %v2692, %v2694
        %v2699 = vshll.u32 %v2696, 16
        %v2700 = vshrl.u32 %v2696, 16
        %v2701 = vshll.u32 %v2697, 16
        %v2702 = vshrl.u32 %v2697, 16
        %vm2703 = vc.u32 %v2695, %v2699
        %v2704 = vsel %vm2703, 1, 0
        %v2705 = vadd.s32 %v2695, %v2699
        %v2706 = vadd.s32 %v2698, %v2704
        %vm2707 = vc.u32 %v2705, %v2701
        %v2708 = vsel %vm2707, 1, 0
        %v2709 = vadd.s32 %v2705, %v2701
        %v2710 = vadd.s32 %v2706, %v2708
        %v2711 = vadd.s32 %v2710, %v2700
        %v2712 = vadd.s32 %v2711, %v2702
        %v2713 = vand.u32 %v2690, 65535
        %v2714 = vshrl.u32 %v2690, 16
        %v2715 = vand.u32 %v2685, 65535
        %v2716 = vshrl.u32 %v2685, 16
        %v2717 = vmul.u32 %v2713, %v2715
        %v2718 = vmul.u32 %v2713, %v2716
        %v2719 = vmul.u32 %v2714, %v2715
        %v2720 = vmul.u32 %v2714, %v2716
        %v2721 = vshll.u32 %v2718, 16
        %v2722 = vshrl.u32 %v2718, 16
        %v2723 = vshll.u32 %v2719, 16
        %v2724 = vshrl.u32 %v2719, 16
        %vm2725 = vc.u32 %v2717, %v2721
        %v2726 = vsel %vm2725, 1, 0
        %v2727 = vadd.s32 %v2717, %v2721
        %v2728 = vadd.s32 %v2720, %v2726
        %vm2729 = vc.u32 %v2727, %v2723
        %v2730 = vsel %vm2729, 1, 0
        %v2731 = vadd.s32 %v2727, %v2723
        %v2732 = vadd.s32 %v2728, %v2730
        %v2733 = vadd.s32 %v2732, %v2722
        %v2734 = vadd.s32 %v2733, %v2724
        %v2735 = vmul.u32 %v2690, %v2681
        %v2736 = vadd.s32 %v2712, %v2731
        %vm2737 = vc.u32 %v2712, %v2731
        %v2738 = vadd.s32 %v2734, 1
        %v2739 = vsel %vm2737, %v2738, %v2734
        %v2740 = vadd.s32 %v2735, %v2739
        %v2741 = vadd.s32 %v2740, 536870912
        %v2742 = vshrl.u32 %v2741, 30
        %v2743 = vshll.u32 %v2742, 30
        %v2744 = vsub.s32 %v2740, %v2743
        %vm2745 = vcmp.lt.s32.totalorder %v2744, 0
        %v2746 = vsub.s32 0, %v2744
        %v2747 = vsel %vm2745, %v2746, %v2744
        %v2748 = vclz %v2747
        %v2749 = vsub.s32 %v2748, 2
        %vm2750 = vcmp.gt.s32.totalorder 0, %v2749
        %v2751 = vsel %vm2750, 0, %v2749
        %v2752 = vsub.s32 32, %v2751
        %v2753 = vshll.u32 %v2744, %v2751
        %v2754 = vshrl.u32 %v2736, %v2752
        %v2755 = vor.u32 %v2753, %v2754
        %v2756 = vsub.s32 4294967266, %v2751
        %v2757 = vadd.s32 %v2756, 127
        %v2758 = vshll.u32 %v2757, 23
        %v2759 = vor.u32 4788187, %v2758
        %v2760 = vand.u32 2147483647, %v2759
        %v2762 = vcvt.s32.f32 %v2755
        %v2763 = vmul.f32 %v2762, %v2760
        %v2764 = vxor.u32 %v2763, 2147483648
        %v2765 = vsel %vm2644, %v2764, %v2763
        %v2766 = vsub.s32 4, %v2742
        %v2767 = vsel %vm2644, %v2766, %v2742
        %v2768 = vsel %vm2643, %v1531, %v2765
        %v2769 = vsel %vm2643, 0, %v2767
        %v2770 = vmul.f32 %v2768, %v2768
        %v2771 = vmul.f32 %v2770, -0.001358992
        %v2772 = vadd.f32 %v2771, 0.041655596
        %v2773 = vmul.f32 %v2770, %v2772
        %v2774 = vadd.f32 %v2773, -0.4999988
        %v2775 = vmul.f32 %v2770, %v2774
        %v2776 = vadd.f32 1.0, %v2775
        %v2777 = vmul.f32 %v2768, %v2768
        %v2778 = vmul.f32 %v2777, -0.00019511016
        %v2779 = vadd.f32 %v2778, 0.008332121
        %v2780 = vmul.f32 %v2777, %v2779
        %v2781 = vadd.f32 %v2780, -0.16666654
        %v2782 = vmul.f32 %v2777, %v2781
        %v2783 = vadd.f32 %v2782, 1.0
        %v2784 = vmul.f32 %v2783, %v2768
        %vm2785 = vweird.f32 %v1531
        %v2786 = vadd.s32 %v2769, 3
        %v2787 = vand.u32 %v2786, 3
        %vm2788 = vcmp.lt.s32.totalorder %v2787, 2
        %vm2789 = vcmp.eq.s32.totalorder %v2787, 0
        %v2790 = vxor.u32 %v2784, 2147483648
        %v2791 = vsel %vm2789, %v2776, %v2790
        %vm2792 = vcmp.eq.s32.totalorder %v2787, 2
        %v2793 = vxor.u32 %v2776, 2147483648
        %v2794 = vsel %vm2792, %v2793, %v2784
        %v2795 = vsel %vm2788, %v2791, %v2794
        %v2796 = vsel %vm2785, nan, %v2795
        %v2797 = vmul.f32 %v1542, %v1711
        %v2798 = vmul.f32 %v1544, %v1866
        %v2799 = vmul.f32 %v1546, %v2021
        %v2800 = vmul.f32 %v1548, %v2176
        %v2801 = vmul.f32 %v1550, %v2331
        %v2802 = vmul.f32 %v1552, %v2486
        %v2803 = vmul.f32 %v1554, %v2641
        %v2804 = vmul.f32 %v1556, %v2796
        %2805 = vst [vmem:[%s330] sm:$0xff] %v2797
        %2806 = vst [vmem:[%s330 + $0x8] sm:$0xff] %v2798
        %2807 = vst [vmem:[%s330 + $0x10] sm:$0xff] %v2799
        %2808 = vst [vmem:[%s330 + $0x18] sm:$0xff] %v2800
        %2809 = vst [vmem:[%s330 + $0x20] sm:$0xff] %v2801
        %2810 = vst [vmem:[%s330 + $0x28] sm:$0xff] %v2802
        %2811 = vst [vmem:[%s330 + $0x30] sm:$0xff] %v2803
        %2812 = vst [vmem:[%s330 + $0x38] sm:$0xff] %v2804
        %s2813 = sand.u32 %s200, 1
        %s2814 = scalar_lea.sflag [#allocation3], %s2813
        %s2815 = sand.u32 %s200, 1
        %s2816 = smul.addr %s2815, 64
        %s2817 = scalar_lea.vmem [#allocation2], %s2816
        // Predicated region
        $region45: #{tpu_custom_call.1} parent=43 // pred_check
          %p2818 = pneg %p210
        $region46: #{tpu_custom_call.1} parent=43 // pred_check_branch
          %2820 = sbr.rel (%p2818) target = $region48
        $region47: #{tpu_custom_call.1} parent=43 // pred_region
          %s2821 = smul.u32 8, %s25
          %2823 = vsyncadd %s2814, 0
          %s2824 = smul.addr %s24, 8
          %s2825 = sadd.s32 %s2821, %s2824
          %s2826 = smul.addr %s2825, 8
          %s2827 = scalar_lea.hbm %s6, %s2826
          %s2828 = sshll.u32 %s2817, 4
          %s2829 = int_to_ptr.vmem [resolvable:$true] %s2828
          %s2830 = sshll.u32 %s2827, 4
          %s2831 = int_to_ptr.hbm [resolvable:$true] %s2830
          %2836 = dma.vmem_to_hbm [thread:$0]  %s2829, 1024, %s2831, %s2814, 128, 128, 8
        $region48: #{tpu_custom_call.1} parent=43 // pred_fallthru
          _
      $region44: #{tpu_custom_call.1} parent=5 // pred_fallthru
        _
      %p2837 = scmp.le.s32.totalorder 2, %s15
      // Predicated region
      $region49: #{tpu_custom_call.1} parent=5 // pred_check
        %p2838 = pneg %p2837
      $region50: #{tpu_custom_call.1} parent=5 // pred_check_branch
        %2840 = sbr.rel (%p2838) target = $region52
      $region51: #{tpu_custom_call.1} parent=5 // pred_region
        %s2841 = ssub.s32 %s15, 2
        // Predicated region
        $region53: #{tpu_custom_call.1} parent=51 // pred_check
          %p2842 = pneg %p216
        $region54: #{tpu_custom_call.1} parent=51 // pred_check_branch
          %2844 = sbr.rel (%p2842) target = $region56
        $region55: #{tpu_custom_call.1} parent=51 // pred_region
          %s2845 = sand.u32 %s201, 1
          %s2846 = scalar_lea.sflag [#allocation3], %s2845
          %s2847 = sand.u32 %s201, 1
          %s2848 = smul.addr %s2847, 64
          %s2849 = scalar_lea.vmem [#allocation2], %s2848
          %2851 = dma.done %s2846, 1024
        $region56: #{tpu_custom_call.1} parent=51 // pred_fallthru
          _
      $region52: #{tpu_custom_call.1} parent=5 // pred_fallthru
        _
    $region6: #{tpu_custom_call.1} parent=1 // loop_footer
      %s19 = sadd.s32 1, %s15
    $region7: #{tpu_custom_call.1} parent=1 // loop_footer_branch
      %14 = sbr.rel target = $region3
    $region8: #{tpu_custom_call.1} parent=1 // loop_exit
      _
    %2852 = vsyncpa [#allocation3], 1
    %s2853 = scalar_lea.sflag [#allocation3], 1
    %2854 = vsyncpa %s2853, 1

</llo_original>
